<compile_context>
chip_gen: v5e
topology: v5e:2x2
jax: 0.10.0
libtpu: 0.0.40
codegen_flags: <defaults>
</compile_context>

<pallas_src>
import functools
import numpy as np
import jax
import jax.numpy as jnp
from jax import lax
from jax.experimental import pallas as pl
from jax.experimental.pallas import tpu as pltpu


def _round_up(a, m):
    return ((a + m - 1) // m) * m


def _use_bf16_activations():
    # bf16 VPU/EUP path exists on v6e/v7x; v5e and older do not have it.
    try:
        kind = jax.devices()[0].device_kind.lower()
    except Exception:
        return True
    return not any(tag in kind for tag in ("v2", "v3", "v4", "v5"))


# ----------------------------- in-kernel math ------------------------------

def _erfc(x):
    # Numerical-Recipes style erfc approximation (rel. error < ~1.2e-7 with an
    # exact divide; the approx reciprocal adds ~1e-3-level error, accepted).
    ax = jnp.abs(x)
    t = pl.reciprocal(1.0 + 0.5 * ax, approx=True)                # EUP slot
    poly = -1.26551223 + t * (1.00002368 + t * (0.37409196 + t * (0.09678418 +
           t * (-0.18628806 + t * (0.27886807 + t * (-1.13520398 + t * (1.48851587 +
           t * (-0.82215223 + t * 0.17087277))))))))
    y = t * jnp.exp(-ax * ax + poly)
    return jnp.where(x >= 0.0, y, 2.0 - y)


def _norm_cdf(z):
    # standard normal CDF = 0.5 * erfc(-z / sqrt(2))
    return 0.5 * _erfc(-z * (1.0 / np.sqrt(2.0)))


def _softplus(x):
    # torch.nn.Softplus semantics: log(1 + exp(x)) with linear tail for x > 20
    return jnp.where(x > 20.0, x, jnp.log(1.0 + jnp.exp(jnp.minimum(x, 20.0))))


# --------------------------------- kernel ----------------------------------

def skew_nll_kernel(x_ref, d_ref, w1t_ref, w2t_ref, b2_ref, w3t_ref, b3_ref,
                    out_ref, *, t_total, bf16_act):
    # Shapes (per grid step, T on the lane axis):
    #   x_ref  : [F+1, TILE_T] f32   (raw w transposed + constant-1 bias row;
    #                                 the per-branch column gather and b1 are
    #                                 folded into W1T)
    #   d_ref  : [x_dim, TILE_T] f32
    #   w1t_ref: [3n, F+1]   bf16
    #   w2t_ref: [H2, 3n]    bf16    b2_ref: [H2, 1] f32   (block-diagonal)
    #   w3t_ref: [3*xp, H2]  bf16    b3_ref: [3*xp, 1] f32 (block-diagonal)
    #   out_ref: [1, TILE_T] f32     (lane-dense mean-over-x_dim loss)
    x_dim = d_ref.shape[0]
    xp = w3t_ref.shape[0] // 3
    tile_t = out_ref.shape[1]

    x_bf = x_ref[...].astype(jnp.bfloat16)                        # [F+1, T]
    acc1 = jnp.dot(w1t_ref[...], x_bf, preferred_element_type=jnp.float32)
    if bf16_act:
        h1 = jnp.tanh(acc1.astype(jnp.bfloat16))                  # bf16 EUP tanh
    else:
        h1 = jnp.tanh(acc1).astype(jnp.bfloat16)                  # f32 tanh (v5e)

    acc2 = jnp.dot(w2t_ref[...], h1,
                   preferred_element_type=jnp.float32) + b2_ref[...]
    if bf16_act:
        h2 = jnp.tanh(acc2.astype(jnp.bfloat16))
    else:
        h2 = jnp.tanh(acc2).astype(jnp.bfloat16)

    y3 = jnp.dot(w3t_ref[...], h2,
                 preferred_element_type=jnp.float32) + b3_ref[...]

    mu    = y3[0:x_dim, :]
    sig   = 10.0 * _softplus(y3[xp:xp + x_dim, :])
    alpha = y3[2 * xp:2 * xp + x_dim, :]

    d = d_ref[...]
    diff = d - mu
    inv_sig = pl.reciprocal(sig, approx=True)                     # EUP slot
    z = alpha * diff * inv_sig

    # _norm_logcdf branches from the PyTorch code.
    rational = 2509.0 * (z - 13.0) * pl.reciprocal(
        (z - 40.0) ** 2 * (z - 5.0), approx=True)
    approx = jnp.where(
        z < -0.1,
        -0.5 * z * z - 4.8 + rational,
        -jnp.exp(-z * 2.0) * 0.5 - jnp.exp(-(z - 0.2) ** 2) * 0.2)
    exact = jnp.log(_norm_cdf(z))

    # (z < -7).any(), restricted to in-bounds lanes so the ragged last tile's
    # undefined padding cannot flip the branch decision.
    # TODO(synk): this .any() is evaluated per T-tile rather than over the
    # whole batch as in PyTorch; identical whenever all tiles agree on the
    # branch (and always when T fits in one tile, as in the demo).
    valid = t_total - pl.program_id(0) * tile_t
    lane = lax.broadcasted_iota(jnp.int32, z.shape, 1)
    z_in = jnp.where(lane < valid, z, 0.0)
    any_small = jnp.min(z_in) < -7.0
    logcdf = jnp.where(any_small, approx, exact)

    scaled = diff * inv_sig
    losses = 0.5 * scaled * scaled + jnp.log(sig) - logcdf        # [x_dim, T]
    out_ref[...] = jnp.mean(losses, axis=0, keepdims=True)        # [1, T]


# ------------------------------ forward impl --------------------------------

def _forward_impl(w, data, w1t, w2t, b2, w3t, b3, *, bf16_act):
    w = w.astype(jnp.float32)
    data = data.astype(jnp.float32)
    T = w.shape[0]
    x_dim = data.shape[1]
    Fp1 = w1t.shape[1]

    # Feature-major inputs; the constant-1 row folds b1 into W1T.
    # TODO(synk): ideally the caller would provide w/data already as
    # [F, T] / [x_dim, T] so even this single fused transpose+concat copy
    # disappears.
    x_aug = jnp.concatenate([w.T, jnp.ones((1, T), jnp.float32)], axis=0)
    d_t = data.T                                                    # [x_dim, T]

    # >= 2 grid steps whenever possible (v7x megacore), capped at 2048 lanes.
    tile_t = min(2048, _round_up(max(pl.cdiv(T, 2), 1), 128))
    n_tiles = pl.cdiv(T, tile_t)

    const = lambda a: pl.BlockSpec(a.shape, lambda i: (0, 0))

    flops = 2 * (w1t.shape[0] * Fp1 + w2t.shape[0] * w2t.shape[1]
                 + w3t.shape[0] * w3t.shape[1]) * T
    transcendentals = (w1t.shape[0] + w2t.shape[0] + 10 * x_dim) * T
    bytes_accessed = (Fp1 + x_dim + 1) * 4 * T + 600_000

    out = pl.pallas_call(
        functools.partial(skew_nll_kernel, t_total=T, bf16_act=bf16_act),
        out_shape=jax.ShapeDtypeStruct((1, T), jnp.float32),
        grid_spec=pltpu.PrefetchScalarGridSpec(
            num_scalar_prefetch=0,
            grid=(n_tiles,),
            in_specs=[
                pl.BlockSpec((Fp1, tile_t), lambda i: (0, i)),
                pl.BlockSpec((x_dim, tile_t), lambda i: (0, i)),
                const(w1t), const(w2t), const(b2), const(w3t), const(b3),
            ],
            out_specs=pl.BlockSpec((1, tile_t), lambda i: (0, i)),
        ),
        compiler_params=pltpu.CompilerParams(
            dimension_semantics=("parallel",),
            vmem_limit_bytes=48 * 1024 * 1024),
        cost_estimate=pl.CostEstimate(
            flops=int(flops),
            transcendentals=int(transcendentals),
            bytes_accessed=int(bytes_accessed)),
    )(x_aug, d_t, w1t, w2t, b2, w3t, b3)

    return out[0]    # [T], mean of losses over the last (x_dim) axis


# ------------------------------ python wrapper ------------------------------

class SkewNLLwithTime:
    """JAX/Pallas re-implementation of the PyTorch SkewNLLwithTime forward."""

    def __init__(self, x_dim, num_freqs, n=256, key=None):
        if key is None:
            key = jax.random.PRNGKey(0)
        self.num_freqs = list(num_freqs)
        self.total_freqs = sum(num_freqs)
        self.x_dim = x_dim
        self.n = n
        self.F = 2 * self.total_freqs + 1
        self.xp = _round_up(x_dim, 8)               # sublane-aligned branch pad

        # param_idxs exactly as in ModelObject.__init__
        self.param_idxs = []
        cumul = 0
        for nf in self.num_freqs:
            idxs = np.concatenate([cumul + np.arange(nf),
                                   self.total_freqs + cumul + np.arange(nf)])
            self.param_idxs.append(idxs.astype(np.int64))
            cumul += nf

        in_dims = [2 * self.num_freqs[k] + 1 for k in range(3)]
        h2_dims = [64, 64, 32]
        H2 = sum(h2_dims)

        def linear_init(k, fan_in, fan_out):
            kw, kb = jax.random.split(k)
            bound = 1.0 / np.sqrt(fan_in)
            W = jax.random.uniform(kw, (fan_in, fan_out), jnp.float32,
                                   minval=-bound, maxval=bound)   # [in, out]
            b = jax.random.uniform(kb, (fan_out,), jnp.float32,
                                   minval=-bound, maxval=bound)
            return np.asarray(W), np.asarray(b)

        # Fused / transposed / pre-gathered weights; b1 folded into W1T's last
        # column (paired with a constant-1 feature row added in the wrapper).
        W1T = np.zeros((3 * n, self.F + 1), np.float32)
        W2T = np.zeros((H2, 3 * n), np.float32)
        b2 = np.zeros((H2, 1), np.float32)
        W3T = np.zeros((3 * self.xp, H2), np.float32)
        b3 = np.zeros((3 * self.xp, 1), np.float32)

        row2 = 0
        for k in range(3):
            key, k1, k2, k3 = jax.random.split(key, 4)
            W1, bb1 = linear_init(k1, in_dims[k], n)
            W2, bb2 = linear_init(k2, n, h2_dims[k])
            W3, bb3 = linear_init(k3, h2_dims[k], x_dim)
            cols = np.concatenate([self.param_idxs[k],
                                   np.array([self.F - 1], dtype=np.int64)])
            W1T[k * n:(k + 1) * n, cols] = W1.T
            W1T[k * n:(k + 1) * n, self.F] = bb1      # folded bias
            W2T[row2:row2 + h2_dims[k], k * n:(k + 1) * n] = W2.T
            b2[row2:row2 + h2_dims[k], 0] = bb2
            W3T[k * self.xp:k * self.xp + x_dim, row2:row2 + h2_dims[k]] = W3.T
            b3[k * self.xp:k * self.xp + x_dim, 0] = bb3
            row2 += h2_dims[k]

        # bf16 weights (MXU-native on all generations); biases & tail stay f32.
        self.w1t = jnp.asarray(W1T, jnp.bfloat16)
        self.w2t = jnp.asarray(W2T, jnp.bfloat16)
        self.b2 = jnp.asarray(b2, jnp.float32)
        self.w3t = jnp.asarray(W3T, jnp.bfloat16)
        self.b3 = jnp.asarray(b3, jnp.float32)

        self.bf16_act = _use_bf16_activations()
        self._fwd = jax.jit(functools.partial(_forward_impl,
                                              bf16_act=self.bf16_act))

    def forward(self, w, data, training_mask=None):
        # TODO(synk): training_mask only changes gradient flow via .detach();
        # the forward value is identical, so it is ignored here.
        return self._fwd(jnp.asarray(w, jnp.float32),
                         jnp.asarray(data, jnp.float32),
                         self.w1t, self.w2t, self.b2, self.w3t, self.b3)


# ---------------------------------- main ------------------------------------

if __name__ == "__main__":
    num_freqs = [2, 2, 2]          # [num_mu, num_sig, num_alpha]
    x_dim = 4
    T = 8
    n_hidden = 256

    root = jax.random.PRNGKey(0)
    k_params, k_w, k_data = jax.random.split(root, 3)

    model = SkewNLLwithTime(x_dim, num_freqs, n=n_hidden, key=k_params)

    F = 2 * sum(num_freqs) + 1     # sines, cosines, and time -> 13
    w = jax.random.normal(k_w, (T, F), jnp.float32)
    data = jax.random.normal(k_data, (T, x_dim), jnp.float32)

    out = model.forward(w, data)
    out = jax.block_until_ready(out)
    assert out.shape == (T,)
    assert bool(jnp.all(jnp.isfinite(out)))
    print("KERNEL_OK")
</pallas_src>

<mosaic_0001>
module attributes {stable_mosaic.version = 11 : i64} {
  func.func @skew_nll_kernel(%arg0: i32, %arg1: memref<14x128xf32, #tpu.memory_space<vmem>>, %arg2: memref<4x128xf32, #tpu.memory_space<vmem>>, %arg3: memref<768x14xbf16, #tpu.memory_space<vmem>>, %arg4: memref<160x768xbf16, #tpu.memory_space<vmem>>, %arg5: memref<160x1xf32, #tpu.memory_space<vmem>>, %arg6: memref<24x160xbf16, #tpu.memory_space<vmem>>, %arg7: memref<24x1xf32, #tpu.memory_space<vmem>>, %arg8: memref<1x128xf32, #tpu.memory_space<vmem>>) attributes {dimension_semantics = [#tpu.dimension_semantics<parallel>], iteration_bounds = array<i64: 1>, scalar_prefetch = 0 : i64, scratch_operands = 0 : i64, tpu.core_type = #tpu.core_type<tc>, window_params = [{transform_indices = @transform_0, window_bounds = array<i64: 14, 128>}, {transform_indices = @transform_1, window_bounds = array<i64: 4, 128>}, {pipeline_mode = #tpu.pipeline_mode<synchronous>, transform_indices = @transform_2, window_bounds = array<i64: 768, 14>}, {pipeline_mode = #tpu.pipeline_mode<synchronous>, transform_indices = @transform_3, window_bounds = array<i64: 160, 768>}, {pipeline_mode = #tpu.pipeline_mode<synchronous>, transform_indices = @transform_4, window_bounds = array<i64: 160, 1>}, {pipeline_mode = #tpu.pipeline_mode<synchronous>, transform_indices = @transform_5, window_bounds = array<i64: 24, 160>}, {pipeline_mode = #tpu.pipeline_mode<synchronous>, transform_indices = @transform_6, window_bounds = array<i64: 24, 1>}, {transform_indices = @transform_7, window_bounds = array<i64: 1, 128>}]} {
    %c0 = arith.constant 0 : index
    %c0_0 = arith.constant 0 : index
    %0 = vector.load %arg1[%c0, %c0_0] : memref<14x128xf32, #tpu.memory_space<vmem>>, vector<14x128xf32>
    %1 = arith.truncf %0 : vector<14x128xf32> to vector<14x128xbf16>
    %c0_1 = arith.constant 0 : index
    %c0_2 = arith.constant 0 : index
    %2 = vector.load %arg3[%c0_1, %c0_2] : memref<768x14xbf16, #tpu.memory_space<vmem>>, vector<768x14xbf16>
    %cst = arith.constant dense<0.000000e+00> : vector<768x128xf32>
    %3 = tpu.matmul %2, %1, %cst {dimension_numbers = #tpu.dot_dimension_numbers<[1], [0], [0], [1], [0, 0, 1, 1], [], []>} : vector<768x14xbf16>, vector<14x128xbf16>, vector<768x128xf32> -> vector<768x128xf32>
    %4 = arith.truncf %3 : vector<768x128xf32> to vector<768x128xbf16>
    %5 = math.tanh %4 : vector<768x128xbf16>
    %c0_3 = arith.constant 0 : index
    %c0_4 = arith.constant 0 : index
    %6 = vector.load %arg4[%c0_3, %c0_4] : memref<160x768xbf16, #tpu.memory_space<vmem>>, vector<160x768xbf16>
    %cst_5 = arith.constant dense<0.000000e+00> : vector<160x128xf32>
    %7 = tpu.matmul %6, %5, %cst_5 {dimension_numbers = #tpu.dot_dimension_numbers<[1], [0], [0], [1], [0, 0, 1, 1], [], []>} : vector<160x768xbf16>, vector<768x128xbf16>, vector<160x128xf32> -> vector<160x128xf32>
    %c0_6 = arith.constant 0 : index
    %c0_7 = arith.constant 0 : index
    %8 = vector.load %arg5[%c0_6, %c0_7] : memref<160x1xf32, #tpu.memory_space<vmem>>, vector<160x1xf32>
    %9 = vector.broadcast %8 : vector<160x1xf32> to vector<160x128xf32>
    %10 = arith.addf %7, %9 : vector<160x128xf32>
    %11 = arith.truncf %10 : vector<160x128xf32> to vector<160x128xbf16>
    %12 = math.tanh %11 : vector<160x128xbf16>
    %c0_8 = arith.constant 0 : index
    %c0_9 = arith.constant 0 : index
    %13 = vector.load %arg6[%c0_8, %c0_9] : memref<24x160xbf16, #tpu.memory_space<vmem>>, vector<24x160xbf16>
    %cst_10 = arith.constant dense<0.000000e+00> : vector<24x128xf32>
    %14 = tpu.matmul %13, %12, %cst_10 {dimension_numbers = #tpu.dot_dimension_numbers<[1], [0], [0], [1], [0, 0, 1, 1], [], []>} : vector<24x160xbf16>, vector<160x128xbf16>, vector<24x128xf32> -> vector<24x128xf32>
    %c0_11 = arith.constant 0 : index
    %c0_12 = arith.constant 0 : index
    %15 = vector.load %arg7[%c0_11, %c0_12] : memref<24x1xf32, #tpu.memory_space<vmem>>, vector<24x1xf32>
    %16 = vector.broadcast %15 : vector<24x1xf32> to vector<24x128xf32>
    %17 = arith.addf %14, %16 : vector<24x128xf32>
    %18 = vector.extract_strided_slice %17 {offsets = [0, 0], sizes = [4, 128], strides = [1, 1]} : vector<24x128xf32> to vector<4x128xf32>
    %19 = vector.extract_strided_slice %17 {offsets = [8, 0], sizes = [4, 128], strides = [1, 1]} : vector<24x128xf32> to vector<4x128xf32>
    %cst_13 = arith.constant 2.000000e+01 : f32
    %20 = vector.broadcast %cst_13 : f32 to vector<4x128xf32>
    %21 = arith.cmpf ogt, %19, %20 : vector<4x128xf32>
    %cst_14 = arith.constant 2.000000e+01 : f32
    %22 = vector.broadcast %cst_14 : f32 to vector<4x128xf32>
    %23 = arith.minimumf %19, %22 : vector<4x128xf32>
    %24 = math.exp %23 : vector<4x128xf32>
    %cst_15 = arith.constant 1.000000e+00 : f32
    %25 = vector.broadcast %cst_15 : f32 to vector<4x128xf32>
    %26 = arith.addf %25, %24 : vector<4x128xf32>
    %27 = math.log %26 : vector<4x128xf32>
    %28 = arith.select %21, %19, %27 : vector<4x128xi1>, vector<4x128xf32>
    %cst_16 = arith.constant 1.000000e+01 : f32
    %29 = vector.broadcast %cst_16 : f32 to vector<4x128xf32>
    %30 = arith.mulf %29, %28 : vector<4x128xf32>
    %31 = vector.extract_strided_slice %17 {offsets = [16, 0], sizes = [4, 128], strides = [1, 1]} : vector<24x128xf32> to vector<4x128xf32>
    %c0_17 = arith.constant 0 : index
    %c0_18 = arith.constant 0 : index
    %32 = vector.load %arg2[%c0_17, %c0_18] : memref<4x128xf32, #tpu.memory_space<vmem>>, vector<4x128xf32>
    %33 = arith.subf %32, %18 : vector<4x128xf32>
    %34 = tpu.reciprocal %30 {approx = true} : vector<4x128xf32> -> vector<4x128xf32>
    %35 = arith.mulf %31, %33 : vector<4x128xf32>
    %36 = arith.mulf %35, %34 : vector<4x128xf32>
    %cst_19 = arith.constant 1.300000e+01 : f32
    %37 = vector.broadcast %cst_19 : f32 to vector<4x128xf32>
    %38 = arith.subf %36, %37 : vector<4x128xf32>
    %cst_20 = arith.constant 2.509000e+03 : f32
    %39 = vector.broadcast %cst_20 : f32 to vector<4x128xf32>
    %40 = arith.mulf %39, %38 : vector<4x128xf32>
    %cst_21 = arith.constant 4.000000e+01 : f32
    %41 = vector.broadcast %cst_21 : f32 to vector<4x128xf32>
    %42 = arith.subf %36, %41 : vector<4x128xf32>
    %43 = arith.mulf %42, %42 : vector<4x128xf32>
    %cst_22 = arith.constant 5.000000e+00 : f32
    %44 = vector.broadcast %cst_22 : f32 to vector<4x128xf32>
    %45 = arith.subf %36, %44 : vector<4x128xf32>
    %46 = arith.mulf %43, %45 : vector<4x128xf32>
    %47 = tpu.reciprocal %46 {approx = true} : vector<4x128xf32> -> vector<4x128xf32>
    %48 = arith.mulf %40, %47 : vector<4x128xf32>
    %cst_23 = arith.constant -1.000000e-01 : f32
    %49 = vector.broadcast %cst_23 : f32 to vector<4x128xf32>
    %50 = arith.cmpf olt, %36, %49 : vector<4x128xf32>
    %cst_24 = arith.constant -5.000000e-01 : f32
    %51 = vector.broadcast %cst_24 : f32 to vector<4x128xf32>
    %52 = arith.mulf %51, %36 : vector<4x128xf32>
    %53 = arith.mulf %52, %36 : vector<4x128xf32>
    %cst_25 = arith.constant 4.800000e+00 : f32
    %54 = vector.broadcast %cst_25 : f32 to vector<4x128xf32>
    %55 = arith.subf %53, %54 : vector<4x128xf32>
    %56 = arith.addf %55, %48 : vector<4x128xf32>
    %cst_26 = arith.constant 0.000000e+00 : f32
    %57 = vector.broadcast %cst_26 : f32 to vector<4x128xf32>
    %58 = arith.subf %57, %36 : vector<4x128xf32>
    %cst_27 = arith.constant 2.000000e+00 : f32
    %59 = vector.broadcast %cst_27 : f32 to vector<4x128xf32>
    %60 = arith.mulf %58, %59 : vector<4x128xf32>
    %61 = math.exp %60 : vector<4x128xf32>
    %cst_28 = arith.constant 0.000000e+00 : f32
    %62 = vector.broadcast %cst_28 : f32 to vector<4x128xf32>
    %63 = arith.subf %62, %61 : vector<4x128xf32>
    %cst_29 = arith.constant 5.000000e-01 : f32
    %64 = vector.broadcast %cst_29 : f32 to vector<4x128xf32>
    %65 = arith.mulf %63, %64 : vector<4x128xf32>
    %cst_30 = arith.constant 2.000000e-01 : f32
    %66 = vector.broadcast %cst_30 : f32 to vector<4x128xf32>
    %67 = arith.subf %36, %66 : vector<4x128xf32>
    %68 = arith.mulf %67, %67 : vector<4x128xf32>
    %cst_31 = arith.constant 0.000000e+00 : f32
    %69 = vector.broadcast %cst_31 : f32 to vector<4x128xf32>
    %70 = arith.subf %69, %68 : vector<4x128xf32>
    %71 = math.exp %70 : vector<4x128xf32>
    %cst_32 = arith.constant 2.000000e-01 : f32
    %72 = vector.broadcast %cst_32 : f32 to vector<4x128xf32>
    %73 = arith.mulf %71, %72 : vector<4x128xf32>
    %74 = arith.subf %65, %73 : vector<4x128xf32>
    %75 = arith.select %50, %56, %74 : vector<4x128xi1>, vector<4x128xf32>
    %cst_33 = arith.constant 0.000000e+00 : f32
    %76 = vector.broadcast %cst_33 : f32 to vector<4x128xf32>
    %77 = arith.subf %76, %36 : vector<4x128xf32>
    %cst_34 = arith.constant 0.707106769 : f32
    %78 = vector.broadcast %cst_34 : f32 to vector<4x128xf32>
    %79 = arith.mulf %77, %78 : vector<4x128xf32>
    %80 = math.absf %79 : vector<4x128xf32>
    %cst_35 = arith.constant 5.000000e-01 : f32
    %81 = vector.broadcast %cst_35 : f32 to vector<4x128xf32>
    %82 = arith.mulf %81, %80 : vector<4x128xf32>
    %cst_36 = arith.constant 1.000000e+00 : f32
    %83 = vector.broadcast %cst_36 : f32 to vector<4x128xf32>
    %84 = arith.addf %83, %82 : vector<4x128xf32>
    %85 = tpu.reciprocal %84 {approx = true} : vector<4x128xf32> -> vector<4x128xf32>
    %cst_37 = arith.constant 0.170872763 : f32
    %86 = vector.broadcast %cst_37 : f32 to vector<4x128xf32>
    %87 = arith.mulf %85, %86 : vector<4x128xf32>
    %cst_38 = arith.constant -0.822152256 : f32
    %88 = vector.broadcast %cst_38 : f32 to vector<4x128xf32>
    %89 = arith.addf %88, %87 : vector<4x128xf32>
    %90 = arith.mulf %85, %89 : vector<4x128xf32>
    %cst_39 = arith.constant 1.48851585 : f32
    %91 = vector.broadcast %cst_39 : f32 to vector<4x128xf32>
    %92 = arith.addf %91, %90 : vector<4x128xf32>
    %93 = arith.mulf %85, %92 : vector<4x128xf32>
    %cst_40 = arith.constant -1.13520396 : f32
    %94 = vector.broadcast %cst_40 : f32 to vector<4x128xf32>
    %95 = arith.addf %94, %93 : vector<4x128xf32>
    %96 = arith.mulf %85, %95 : vector<4x128xf32>
    %cst_41 = arith.constant 0.278868079 : f32
    %97 = vector.broadcast %cst_41 : f32 to vector<4x128xf32>
    %98 = arith.addf %97, %96 : vector<4x128xf32>
    %99 = arith.mulf %85, %98 : vector<4x128xf32>
    %cst_42 = arith.constant -0.186288059 : f32
    %100 = vector.broadcast %cst_42 : f32 to vector<4x128xf32>
    %101 = arith.addf %100, %99 : vector<4x128xf32>
    %102 = arith.mulf %85, %101 : vector<4x128xf32>
    %cst_43 = arith.constant 0.0967841818 : f32
    %103 = vector.broadcast %cst_43 : f32 to vector<4x128xf32>
    %104 = arith.addf %103, %102 : vector<4x128xf32>
    %105 = arith.mulf %85, %104 : vector<4x128xf32>
    %cst_44 = arith.constant 0.374091953 : f32
    %106 = vector.broadcast %cst_44 : f32 to vector<4x128xf32>
    %107 = arith.addf %106, %105 : vector<4x128xf32>
    %108 = arith.mulf %85, %107 : vector<4x128xf32>
    %cst_45 = arith.constant 1.00002372 : f32
    %109 = vector.broadcast %cst_45 : f32 to vector<4x128xf32>
    %110 = arith.addf %109, %108 : vector<4x128xf32>
    %111 = arith.mulf %85, %110 : vector<4x128xf32>
    %cst_46 = arith.constant -1.26551223 : f32
    %112 = vector.broadcast %cst_46 : f32 to vector<4x128xf32>
    %113 = arith.addf %112, %111 : vector<4x128xf32>
    %cst_47 = arith.constant 0.000000e+00 : f32
    %114 = vector.broadcast %cst_47 : f32 to vector<4x128xf32>
    %115 = arith.subf %114, %80 : vector<4x128xf32>
    %116 = arith.mulf %115, %80 : vector<4x128xf32>
    %117 = arith.addf %116, %113 : vector<4x128xf32>
    %118 = math.exp %117 : vector<4x128xf32>
    %119 = arith.mulf %85, %118 : vector<4x128xf32>
    %cst_48 = arith.constant 0.000000e+00 : f32
    %120 = vector.broadcast %cst_48 : f32 to vector<4x128xf32>
    %121 = arith.cmpf oge, %79, %120 : vector<4x128xf32>
    %cst_49 = arith.constant 2.000000e+00 : f32
    %122 = vector.broadcast %cst_49 : f32 to vector<4x128xf32>
    %123 = arith.subf %122, %119 : vector<4x128xf32>
    %124 = arith.select %121, %119, %123 : vector<4x128xi1>, vector<4x128xf32>
    %cst_50 = arith.constant 5.000000e-01 : f32
    %125 = vector.broadcast %cst_50 : f32 to vector<4x128xf32>
    %126 = arith.mulf %125, %124 : vector<4x128xf32>
    %127 = math.log %126 : vector<4x128xf32>
    %c128_i32 = arith.constant 128 : i32
    %128 = arith.muli %arg0, %c128_i32 : i32
    %c8_i32 = arith.constant 8 : i32
    %129 = arith.subi %c8_i32, %128 : i32
    %130 = tpu.iota {dimensions = array<i32: 1>} : vector<4x128xi32>
    %131 = vector.broadcast %129 : i32 to vector<4x128xi32>
    %132 = arith.cmpi slt, %130, %131 : vector<4x128xi32>
    %cst_51 = arith.constant 0.000000e+00 : f32
    %133 = vector.broadcast %cst_51 : f32 to vector<4x128xf32>
    %134 = arith.select %132, %36, %133 : vector<4x128xi1>, vector<4x128xf32>
    %135 = vector.shape_cast %134 : vector<4x128xf32> to vector<1x4x128xf32>
    %cst_52 = arith.constant dense<0x7F800000> : vector<1xf32>
    %136 = vector.multi_reduction <minimumf>, %135, %cst_52 [1, 2] : vector<1x4x128xf32> to vector<1xf32>
    %137 = vector.shape_cast %136 : vector<1xf32> to vector<1x1x1xf32>
    %138 = vector.extract %137[0, 0, 0] : f32 from vector<1x1x1xf32>
    %cst_53 = arith.constant -7.000000e+00 : f32
    %139 = arith.cmpf olt, %138, %cst_53 : f32
    %140 = arith.select %139, %75, %127 : vector<4x128xf32>
    %141 = arith.mulf %33, %34 : vector<4x128xf32>
    %cst_54 = arith.constant 5.000000e-01 : f32
    %142 = vector.broadcast %cst_54 : f32 to vector<4x128xf32>
    %143 = arith.mulf %142, %141 : vector<4x128xf32>
    %144 = arith.mulf %143, %141 : vector<4x128xf32>
    %145 = math.log %30 : vector<4x128xf32>
    %146 = arith.addf %144, %145 : vector<4x128xf32>
    %147 = arith.subf %146, %140 : vector<4x128xf32>
    %cst_55 = arith.constant dense<0.000000e+00> : vector<128xf32>
    %148 = vector.multi_reduction <add>, %147, %cst_55 [0] : vector<4x128xf32> to vector<128xf32>
    %149 = vector.shape_cast %148 : vector<128xf32> to vector<1x128xf32>
    %cst_56 = arith.constant 4.000000e+00 : f32
    %150 = vector.broadcast %cst_56 : f32 to vector<1x128xf32>
    %151 = arith.divf %149, %150 : vector<1x128xf32>
    %c0_57 = arith.constant 0 : index
    %c0_58 = arith.constant 0 : index
    %152 = vector.load %arg8[%c0_57, %c0_58] : memref<1x128xf32, #tpu.memory_space<vmem>>, vector<1x128xf32>
    tpu.vector_store %arg8[%c0_57, %c0_58], %151 {strides = array<i32>} : memref<1x128xf32, #tpu.memory_space<vmem>>, vector<1x128xf32>,
    return
  }
  func.func @transform_0(%arg0: i32) -> (i32, i32) {
    %c0_i32 = arith.constant 0 : i32
    %c0_i32_0 = arith.constant 0 : i32
    return %c0_i32, %arg0 : i32, i32
  }
  func.func @transform_1(%arg0: i32) -> (i32, i32) {
    %c0_i32 = arith.constant 0 : i32
    %c0_i32_0 = arith.constant 0 : i32
    return %c0_i32, %arg0 : i32, i32
  }
  func.func @transform_2(%arg0: i32) -> (i32, i32) {
    %c0_i32 = arith.constant 0 : i32
    %c0_i32_0 = arith.constant 0 : i32
    %c0_i32_1 = arith.constant 0 : i32
    return %c0_i32, %c0_i32_0 : i32, i32
  }
  func.func @transform_3(%arg0: i32) -> (i32, i32) {
    %c0_i32 = arith.constant 0 : i32
    %c0_i32_0 = arith.constant 0 : i32
    %c0_i32_1 = arith.constant 0 : i32
    return %c0_i32, %c0_i32_0 : i32, i32
  }
  func.func @transform_4(%arg0: i32) -> (i32, i32) {
    %c0_i32 = arith.constant 0 : i32
    %c0_i32_0 = arith.constant 0 : i32
    %c0_i32_1 = arith.constant 0 : i32
    return %c0_i32, %c0_i32_0 : i32, i32
  }
  func.func @transform_5(%arg0: i32) -> (i32, i32) {
    %c0_i32 = arith.constant 0 : i32
    %c0_i32_0 = arith.constant 0 : i32
    %c0_i32_1 = arith.constant 0 : i32
    return %c0_i32, %c0_i32_0 : i32, i32
  }
  func.func @transform_6(%arg0: i32) -> (i32, i32) {
    %c0_i32 = arith.constant 0 : i32
    %c0_i32_0 = arith.constant 0 : i32
    %c0_i32_1 = arith.constant 0 : i32
    return %c0_i32, %c0_i32_0 : i32, i32
  }
  func.func @transform_7(%arg0: i32) -> (i32, i32) {
    %c0_i32 = arith.constant 0 : i32
    %c0_i32_0 = arith.constant 0 : i32
    return %c0_i32, %arg0 : i32, i32
  }
}

</mosaic_0001>

<llo_original>
// kernel: _forward_impl.1
$region0: #{_forward_impl.1}
  #allocation0 [shape = 'u32[]', space=smem, size = 0x4, offset = 0x4, fixed_abs, tag = 'smem constant byte address 0x4 - core index']
  #allocation1 [shape = 'u32[72,128]{1,0:T(1,128)}', space=vmem, size = 0x9000, scoped, tag = 'internal scratch']
  %s0 = inlined_call_operand.vmem [shape: f32[14,8], index: 0, kind: input, shape index: {}]
  %s1 = inlined_call_operand.vmem [shape: f32[4,8], index: 1, kind: input, shape index: {}]
  %s2 = inlined_call_operand.vmem [shape: bf16[768,14], index: 2, kind: input, shape index: {}]
  %s3 = inlined_call_operand.vmem [shape: bf16[160,768], index: 3, kind: input, shape index: {}]
  %s4 = inlined_call_operand.vmem [shape: f32[160,1], index: 4, kind: input, shape index: {}]
  %s5 = inlined_call_operand.vmem [shape: bf16[24,160], index: 5, kind: input, shape index: {}]
  %s6 = inlined_call_operand.vmem [shape: f32[24,1], index: 6, kind: input, shape index: {}]
  %s7 = inlined_call_operand.hbm [shape: f32[1,8], index: 7, kind: output, shape index: {}]
  %s8 = sld [smem:[#allocation0]]
  $region38: #{_forward_impl.1} parent=0
    _
  %s10 = ssub.s32 1, %s8
  %s11 = scalar_select 0, %s10, %s8
  $region1: #{_forward_impl.1} parent=0
    #allocation2 [shape = 'u8[512]{0}', space=vmem, size = 0x400, scoped, tag = 'output window, operand 0, single buffered']
    #allocation3 [shape = 's32[1]{0}', space=sflag, size = 0x4, scoped, tag = 'scoped memory for _forward_impl.1']
    %12 = vsyncpa [#allocation3], 0
    // Predicated region
    $region2: #{_forward_impl.1} parent=1 // pred_check
      _
    $region3: #{_forward_impl.1} parent=1 // pred_check_branch
      %14 = sbr.rel (0) target = $region5
    $region4: #{_forward_impl.1} parent=1 // pred_region
      _
    $region5: #{_forward_impl.1} parent=1 // pred_fallthru
      _
    // Predicated region
    $region6: #{_forward_impl.1} parent=1 // pred_check
      _
    $region7: #{_forward_impl.1} parent=1 // pred_check_branch
      %16 = sbr.rel (0) target = $region9
    $region8: #{_forward_impl.1} parent=1 // pred_region
      _
    $region9: #{_forward_impl.1} parent=1 // pred_fallthru
      _
    // Predicated region
    $region10: #{_forward_impl.1} parent=1 // pred_check
      _
    $region11: #{_forward_impl.1} parent=1 // pred_check_branch
      %18 = sbr.rel (0) target = $region13
    $region12: #{_forward_impl.1} parent=1 // pred_region
      _
    $region13: #{_forward_impl.1} parent=1 // pred_fallthru
      _
    // Predicated region
    $region14: #{_forward_impl.1} parent=1 // pred_check
      _
    $region15: #{_forward_impl.1} parent=1 // pred_check_branch
      %20 = sbr.rel (0) target = $region17
    $region16: #{_forward_impl.1} parent=1 // pred_region
      _
    $region17: #{_forward_impl.1} parent=1 // pred_fallthru
      _
    // Predicated region
    $region18: #{_forward_impl.1} parent=1 // pred_check
      _
    $region19: #{_forward_impl.1} parent=1 // pred_check_branch
      %22 = sbr.rel (0) target = $region21
    $region20: #{_forward_impl.1} parent=1 // pred_region
      _
    $region21: #{_forward_impl.1} parent=1 // pred_fallthru
      _
    // Predicated region
    $region22: #{_forward_impl.1} parent=1 // pred_check
      _
    $region23: #{_forward_impl.1} parent=1 // pred_check_branch
      %24 = sbr.rel (0) target = $region25
    $region24: #{_forward_impl.1} parent=1 // pred_region
      _
    $region25: #{_forward_impl.1} parent=1 // pred_fallthru
      _
    // Predicated region
    $region26: #{_forward_impl.1} parent=1 // pred_check
      _
    $region27: #{_forward_impl.1} parent=1 // pred_check_branch
      %26 = sbr.rel (0) target = $region29
    $region28: #{_forward_impl.1} parent=1 // pred_region
      _
    $region29: #{_forward_impl.1} parent=1 // pred_fallthru
      _
    %v28 = vld [vmem:[%s0] sm:$0xff]
    %v29 = vld [vmem:[%s0 + $0x8] sm:$0x3f]
    %v30 = vpack.c.bf16 %v29, %v28
    %v31 = vld [vmem:[%s2] sm:$0xf]
    %v32 = vld [vmem:[%s2 + $0x4] sm:$0xf]
    %v33 = vld [vmem:[%s2 + $0x8] sm:$0xf]
    %v34 = vld [vmem:[%s2 + $0xc] sm:$0xf]
    %v35 = vld [vmem:[%s2 + $0x10] sm:$0xf]
    %v36 = vld [vmem:[%s2 + $0x14] sm:$0xf]
    %v37 = vld [vmem:[%s2 + $0x18] sm:$0xf]
    %v38 = vld [vmem:[%s2 + $0x1c] sm:$0xf]
    %v39 = vld [vmem:[%s2 + $0x20] sm:$0xf]
    %v40 = vld [vmem:[%s2 + $0x24] sm:$0xf]
    %v41 = vld [vmem:[%s2 + $0x28] sm:$0xf]
    %v42 = vld [vmem:[%s2 + $0x2c] sm:$0xf]
    %v43 = vld [vmem:[%s2 + $0x30] sm:$0xf]
    %v44 = vld [vmem:[%s2 + $0x34] sm:$0xf]
    %v45 = vld [vmem:[%s2 + $0x38] sm:$0xf]
    %v46 = vld [vmem:[%s2 + $0x3c] sm:$0xf]
    %v47 = vld [vmem:[%s2 + $0x40] sm:$0xf]
    %v48 = vld [vmem:[%s2 + $0x44] sm:$0xf]
    %v49 = vld [vmem:[%s2 + $0x48] sm:$0xf]
    %v50 = vld [vmem:[%s2 + $0x4c] sm:$0xf]
    %v51 = vld [vmem:[%s2 + $0x50] sm:$0xf]
    %v52 = vld [vmem:[%s2 + $0x54] sm:$0xf]
    %v53 = vld [vmem:[%s2 + $0x58] sm:$0xf]
    %v54 = vld [vmem:[%s2 + $0x5c] sm:$0xf]
    %v55 = vld [vmem:[%s2 + $0x60] sm:$0xf]
    %v56 = vld [vmem:[%s2 + $0x64] sm:$0xf]
    %v57 = vld [vmem:[%s2 + $0x68] sm:$0xf]
    %v58 = vld [vmem:[%s2 + $0x6c] sm:$0xf]
    %v59 = vld [vmem:[%s2 + $0x70] sm:$0xf]
    %v60 = vld [vmem:[%s2 + $0x74] sm:$0xf]
    %v61 = vld [vmem:[%s2 + $0x78] sm:$0xf]
    %v62 = vld [vmem:[%s2 + $0x7c] sm:$0xf]
    %v63 = vld [vmem:[%s2 + $0x80] sm:$0xf]
    %v64 = vld [vmem:[%s2 + $0x84] sm:$0xf]
    %v65 = vld [vmem:[%s2 + $0x88] sm:$0xf]
    %v66 = vld [vmem:[%s2 + $0x8c] sm:$0xf]
    %v67 = vld [vmem:[%s2 + $0x90] sm:$0xf]
    %v68 = vld [vmem:[%s2 + $0x94] sm:$0xf]
    %v69 = vld [vmem:[%s2 + $0x98] sm:$0xf]
    %v70 = vld [vmem:[%s2 + $0x9c] sm:$0xf]
    %v71 = vld [vmem:[%s2 + $0xa0] sm:$0xf]
    %v72 = vld [vmem:[%s2 + $0xa4] sm:$0xf]
    %v73 = vld [vmem:[%s2 + $0xa8] sm:$0xf]
    %v74 = vld [vmem:[%s2 + $0xac] sm:$0xf]
    %v75 = vld [vmem:[%s2 + $0xb0] sm:$0xf]
    %v76 = vld [vmem:[%s2 + $0xb4] sm:$0xf]
    %v77 = vld [vmem:[%s2 + $0xb8] sm:$0xf]
    %v78 = vld [vmem:[%s2 + $0xbc] sm:$0xf]
    %v79 = vld [vmem:[%s2 + $0xc0] sm:$0xf]
    %v80 = vld [vmem:[%s2 + $0xc4] sm:$0xf]
    %v81 = vld [vmem:[%s2 + $0xc8] sm:$0xf]
    %v82 = vld [vmem:[%s2 + $0xcc] sm:$0xf]
    %v83 = vld [vmem:[%s2 + $0xd0] sm:$0xf]
    %v84 = vld [vmem:[%s2 + $0xd4] sm:$0xf]
    %v85 = vld [vmem:[%s2 + $0xd8] sm:$0xf]
    %v86 = vld [vmem:[%s2 + $0xdc] sm:$0xf]
    %v87 = vld [vmem:[%s2 + $0xe0] sm:$0xf]
    %v88 = vld [vmem:[%s2 + $0xe4] sm:$0xf]
    %v89 = vld [vmem:[%s2 + $0xe8] sm:$0xf]
    %v90 = vld [vmem:[%s2 + $0xec] sm:$0xf]
    %v91 = vld [vmem:[%s2 + $0xf0] sm:$0xf]
    %v92 = vld [vmem:[%s2 + $0xf4] sm:$0xf]
    %v93 = vld [vmem:[%s2 + $0xf8] sm:$0xf]
    %v94 = vld [vmem:[%s2 + $0xfc] sm:$0xf]
    %v95 = vld [vmem:[%s2 + $0x100] sm:$0xf]
    %v96 = vld [vmem:[%s2 + $0x104] sm:$0xf]
    %v97 = vld [vmem:[%s2 + $0x108] sm:$0xf]
    %v98 = vld [vmem:[%s2 + $0x10c] sm:$0xf]
    %v99 = vld [vmem:[%s2 + $0x110] sm:$0xf]
    %v100 = vld [vmem:[%s2 + $0x114] sm:$0xf]
    %v101 = vld [vmem:[%s2 + $0x118] sm:$0xf]
    %v102 = vld [vmem:[%s2 + $0x11c] sm:$0xf]
    %v103 = vld [vmem:[%s2 + $0x120] sm:$0xf]
    %v104 = vld [vmem:[%s2 + $0x124] sm:$0xf]
    %v105 = vld [vmem:[%s2 + $0x128] sm:$0xf]
    %v106 = vld [vmem:[%s2 + $0x12c] sm:$0xf]
    %v107 = vld [vmem:[%s2 + $0x130] sm:$0xf]
    %v108 = vld [vmem:[%s2 + $0x134] sm:$0xf]
    %v109 = vld [vmem:[%s2 + $0x138] sm:$0xf]
    %v110 = vld [vmem:[%s2 + $0x13c] sm:$0xf]
    %v111 = vld [vmem:[%s2 + $0x140] sm:$0xf]
    %v112 = vld [vmem:[%s2 + $0x144] sm:$0xf]
    %v113 = vld [vmem:[%s2 + $0x148] sm:$0xf]
    %v114 = vld [vmem:[%s2 + $0x14c] sm:$0xf]
    %v115 = vld [vmem:[%s2 + $0x150] sm:$0xf]
    %v116 = vld [vmem:[%s2 + $0x154] sm:$0xf]
    %v117 = vld [vmem:[%s2 + $0x158] sm:$0xf]
    %v118 = vld [vmem:[%s2 + $0x15c] sm:$0xf]
    %v119 = vld [vmem:[%s2 + $0x160] sm:$0xf]
    %v120 = vld [vmem:[%s2 + $0x164] sm:$0xf]
    %v121 = vld [vmem:[%s2 + $0x168] sm:$0xf]
    %v122 = vld [vmem:[%s2 + $0x16c] sm:$0xf]
    %v123 = vld [vmem:[%s2 + $0x170] sm:$0xf]
    %v124 = vld [vmem:[%s2 + $0x174] sm:$0xf]
    %v125 = vld [vmem:[%s2 + $0x178] sm:$0xf]
    %v126 = vld [vmem:[%s2 + $0x17c] sm:$0xf]
    %v223 = vunpack.c.l.b16 %v31
    %v224 = vunpack.c.l.b16 %v32
    %v225 = vunpack.c.l.b16 %v33
    %v226 = vunpack.c.l.b16 %v34
    %v227 = vunpack.c.l.b16 %v35
    %v228 = vunpack.c.l.b16 %v36
    %v229 = vunpack.c.l.b16 %v37
    %v230 = vunpack.c.l.b16 %v38
    %v231 = vunpack.c.l.b16 %v39
    %v232 = vunpack.c.l.b16 %v40
    %v233 = vunpack.c.l.b16 %v41
    %v234 = vunpack.c.l.b16 %v42
    %v235 = vunpack.c.l.b16 %v43
    %v236 = vunpack.c.l.b16 %v44
    %v237 = vunpack.c.l.b16 %v45
    %v238 = vunpack.c.l.b16 %v46
    %v239 = vunpack.c.l.b16 %v47
    %v240 = vunpack.c.l.b16 %v48
    %v241 = vunpack.c.l.b16 %v49
    %v242 = vunpack.c.l.b16 %v50
    %v243 = vunpack.c.l.b16 %v51
    %v244 = vunpack.c.l.b16 %v52
    %v245 = vunpack.c.l.b16 %v53
    %v246 = vunpack.c.l.b16 %v54
    %v247 = vunpack.c.l.b16 %v55
    %v248 = vunpack.c.l.b16 %v56
    %v249 = vunpack.c.l.b16 %v57
    %v250 = vunpack.c.l.b16 %v58
    %v251 = vunpack.c.l.b16 %v59
    %v252 = vunpack.c.l.b16 %v60
    %v253 = vunpack.c.l.b16 %v61
    %v254 = vunpack.c.l.b16 %v62
    %v255 = vunpack.c.l.b16 %v63
    %v256 = vunpack.c.l.b16 %v64
    %v257 = vunpack.c.l.b16 %v65
    %v258 = vunpack.c.l.b16 %v66
    %v259 = vunpack.c.l.b16 %v67
    %v260 = vunpack.c.l.b16 %v68
    %v261 = vunpack.c.l.b16 %v69
    %v262 = vunpack.c.l.b16 %v70
    %v263 = vunpack.c.l.b16 %v71
    %v264 = vunpack.c.l.b16 %v72
    %v265 = vunpack.c.l.b16 %v73
    %v266 = vunpack.c.l.b16 %v74
    %v267 = vunpack.c.l.b16 %v75
    %v268 = vunpack.c.l.b16 %v76
    %v269 = vunpack.c.l.b16 %v77
    %v270 = vunpack.c.l.b16 %v78
    %v271 = vunpack.c.l.b16 %v79
    %v272 = vunpack.c.l.b16 %v80
    %v273 = vunpack.c.l.b16 %v81
    %v274 = vunpack.c.l.b16 %v82
    %v275 = vunpack.c.l.b16 %v83
    %v276 = vunpack.c.l.b16 %v84
    %v277 = vunpack.c.l.b16 %v85
    %v278 = vunpack.c.l.b16 %v86
    %v279 = vunpack.c.l.b16 %v87
    %v280 = vunpack.c.l.b16 %v88
    %v281 = vunpack.c.l.b16 %v89
    %v282 = vunpack.c.l.b16 %v90
    %v283 = vunpack.c.l.b16 %v91
    %v284 = vunpack.c.l.b16 %v92
    %v285 = vunpack.c.l.b16 %v93
    %v286 = vunpack.c.l.b16 %v94
    %v287 = vunpack.c.l.b16 %v95
    %v288 = vunpack.c.l.b16 %v96
    %v289 = vunpack.c.l.b16 %v97
    %v290 = vunpack.c.l.b16 %v98
    %v291 = vunpack.c.l.b16 %v99
    %v292 = vunpack.c.l.b16 %v100
    %v293 = vunpack.c.l.b16 %v101
    %v294 = vunpack.c.l.b16 %v102
    %v295 = vunpack.c.l.b16 %v103
    %v296 = vunpack.c.l.b16 %v104
    %v297 = vunpack.c.l.b16 %v105
    %v298 = vunpack.c.l.b16 %v106
    %v299 = vunpack.c.l.b16 %v107
    %v300 = vunpack.c.l.b16 %v108
    %v301 = vunpack.c.l.b16 %v109
    %v302 = vunpack.c.l.b16 %v110
    %v303 = vunpack.c.l.b16 %v111
    %v304 = vunpack.c.l.b16 %v112
    %v305 = vunpack.c.l.b16 %v113
    %v306 = vunpack.c.l.b16 %v114
    %v307 = vunpack.c.l.b16 %v115
    %v308 = vunpack.c.l.b16 %v116
    %v309 = vunpack.c.l.b16 %v117
    %v310 = vunpack.c.l.b16 %v118
    %v311 = vunpack.c.l.b16 %v119
    %v312 = vunpack.c.l.b16 %v120
    %v313 = vunpack.c.l.b16 %v121
    %v314 = vunpack.c.l.b16 %v122
    %v315 = vunpack.c.l.b16 %v123
    %v316 = vunpack.c.l.b16 %v124
    %v317 = vunpack.c.l.b16 %v125
    %v318 = vunpack.c.l.b16 %v126
    %v319 = vpack.c.b16 %v224, %v223
    %v320 = vpack.c.b16 %v226, %v225
    %v321 = vpack.c.b16 %v228, %v227
    %v322 = vpack.c.b16 %v230, %v229
    %v323 = vpack.c.b16 %v232, %v231
    %v324 = vpack.c.b16 %v234, %v233
    %v325 = vpack.c.b16 %v236, %v235
    %v326 = vpack.c.b16 %v238, %v237
    %v327 = vpack.c.b16 %v240, %v239
    %v328 = vpack.c.b16 %v242, %v241
    %v329 = vpack.c.b16 %v244, %v243
    %v330 = vpack.c.b16 %v246, %v245
    %v331 = vpack.c.b16 %v248, %v247
    %v332 = vpack.c.b16 %v250, %v249
    %v333 = vpack.c.b16 %v252, %v251
    %v334 = vpack.c.b16 %v254, %v253
    %v335 = vpack.c.b16 %v256, %v255
    %v336 = vpack.c.b16 %v258, %v257
    %v337 = vpack.c.b16 %v260, %v259
    %v338 = vpack.c.b16 %v262, %v261
    %v339 = vpack.c.b16 %v264, %v263
    %v340 = vpack.c.b16 %v266, %v265
    %v341 = vpack.c.b16 %v268, %v267
    %v342 = vpack.c.b16 %v270, %v269
    %v343 = vpack.c.b16 %v272, %v271
    %v344 = vpack.c.b16 %v274, %v273
    %v345 = vpack.c.b16 %v276, %v275
    %v346 = vpack.c.b16 %v278, %v277
    %v347 = vpack.c.b16 %v280, %v279
    %v348 = vpack.c.b16 %v282, %v281
    %v349 = vpack.c.b16 %v284, %v283
    %v350 = vpack.c.b16 %v286, %v285
    %v351 = vpack.c.b16 %v288, %v287
    %v352 = vpack.c.b16 %v290, %v289
    %v353 = vpack.c.b16 %v292, %v291
    %v354 = vpack.c.b16 %v294, %v293
    %v355 = vpack.c.b16 %v296, %v295
    %v356 = vpack.c.b16 %v298, %v297
    %v357 = vpack.c.b16 %v300, %v299
    %v358 = vpack.c.b16 %v302, %v301
    %v359 = vpack.c.b16 %v304, %v303
    %v360 = vpack.c.b16 %v306, %v305
    %v361 = vpack.c.b16 %v308, %v307
    %v362 = vpack.c.b16 %v310, %v309
    %v363 = vpack.c.b16 %v312, %v311
    %v364 = vpack.c.b16 %v314, %v313
    %v365 = vpack.c.b16 %v316, %v315
    %v366 = vpack.c.b16 %v318, %v317
    %vm367 = vcmask 113664
    %v369 = vsel %vm367, %v319, 0
    %v372 = vsel %vm367, %v320, 0
    %v375 = vsel %vm367, %v321, 0
    %v378 = vsel %vm367, %v322, 0
    %v381 = vsel %vm367, %v323, 0
    %v384 = vsel %vm367, %v324, 0
    %v387 = vsel %vm367, %v325, 0
    %v390 = vsel %vm367, %v326, 0
    %v393 = vsel %vm367, %v327, 0
    %v396 = vsel %vm367, %v328, 0
    %v399 = vsel %vm367, %v329, 0
    %v402 = vsel %vm367, %v330, 0
    %v405 = vsel %vm367, %v331, 0
    %v408 = vsel %vm367, %v332, 0
    %v411 = vsel %vm367, %v333, 0
    %v414 = vsel %vm367, %v334, 0
    %v417 = vsel %vm367, %v335, 0
    %v420 = vsel %vm367, %v336, 0
    %v423 = vsel %vm367, %v337, 0
    %v426 = vsel %vm367, %v338, 0
    %v429 = vsel %vm367, %v339, 0
    %v432 = vsel %vm367, %v340, 0
    %v435 = vsel %vm367, %v341, 0
    %v438 = vsel %vm367, %v342, 0
    %v441 = vsel %vm367, %v343, 0
    %v444 = vsel %vm367, %v344, 0
    %v447 = vsel %vm367, %v345, 0
    %v450 = vsel %vm367, %v346, 0
    %v453 = vsel %vm367, %v347, 0
    %v456 = vsel %vm367, %v348, 0
    %v459 = vsel %vm367, %v349, 0
    %v462 = vsel %vm367, %v350, 0
    %v465 = vsel %vm367, %v351, 0
    %v468 = vsel %vm367, %v352, 0
    %v471 = vsel %vm367, %v353, 0
    %v474 = vsel %vm367, %v354, 0
    %v477 = vsel %vm367, %v355, 0
    %v480 = vsel %vm367, %v356, 0
    %v483 = vsel %vm367, %v357, 0
    %v486 = vsel %vm367, %v358, 0
    %v489 = vsel %vm367, %v359, 0
    %v492 = vsel %vm367, %v360, 0
    %v495 = vsel %vm367, %v361, 0
    %v498 = vsel %vm367, %v362, 0
    %v501 = vsel %vm367, %v363, 0
    %v504 = vsel %vm367, %v364, 0
    %v507 = vsel %vm367, %v365, 0
    %v510 = vsel %vm367, %v366, 0
    %vm512 = vcmask 1046528
    %v514 = vsel %vm512, %v30, 0
    %516 = vmatpush.bf16.msra.mxu0 0
    %517 = vmatpush.bf16.msra.mxu0 0
    %518 = vmatpush.bf16.msra.mxu0 0
    %519 = vmatpush.bf16.msra.mxu0 0
    %520 = vmatpush.bf16.msra.mxu0 0
    %521 = vmatpush.bf16.msra.mxu0 0
    %522 = vmatpush.bf16.msra.mxu0 0
    %523 = vmatpush.bf16.msra.mxu0 %v514
    %524 = vmatmul.bf16.gmra.mxu0 %v369
    %v525 = vpop.f32.mrf.mxu0
    %v526 = vadd.f32 0.0, %v525
    %v527 = vpop.f32.mrf.mxu0
    %v528 = vadd.f32 0.0, %v527
    %529 = vmatmul.bf16.gmra.mxu0 %v372
    %v530 = vpop.f32.mrf.mxu0
    %v531 = vadd.f32 0.0, %v530
    %v532 = vpop.f32.mrf.mxu0
    %v533 = vadd.f32 0.0, %v532
    %534 = vmatmul.bf16.gmra.mxu0 %v375
    %v535 = vpop.f32.mrf.mxu0
    %v536 = vadd.f32 0.0, %v535
    %v537 = vpop.f32.mrf.mxu0
    %v538 = vadd.f32 0.0, %v537
    %539 = vmatmul.bf16.gmra.mxu0 %v378
    %v540 = vpop.f32.mrf.mxu0
    %v541 = vadd.f32 0.0, %v540
    %v542 = vpop.f32.mrf.mxu0
    %v543 = vadd.f32 0.0, %v542
    %544 = vmatmul.bf16.gmra.mxu0 %v381
    %v545 = vpop.f32.mrf.mxu0
    %v546 = vadd.f32 0.0, %v545
    %v547 = vpop.f32.mrf.mxu0
    %v548 = vadd.f32 0.0, %v547
    %549 = vmatmul.bf16.gmra.mxu0 %v384
    %v550 = vpop.f32.mrf.mxu0
    %v551 = vadd.f32 0.0, %v550
    %v552 = vpop.f32.mrf.mxu0
    %v553 = vadd.f32 0.0, %v552
    %554 = vmatmul.bf16.gmra.mxu0 %v387
    %v555 = vpop.f32.mrf.mxu0
    %v556 = vadd.f32 0.0, %v555
    %v557 = vpop.f32.mrf.mxu0
    %v558 = vadd.f32 0.0, %v557
    %559 = vmatmul.bf16.gmra.mxu0 %v390
    %v560 = vpop.f32.mrf.mxu0
    %v561 = vadd.f32 0.0, %v560
    %v562 = vpop.f32.mrf.mxu0
    %v563 = vadd.f32 0.0, %v562
    %564 = vmatmul.bf16.gmra.mxu0 %v393
    %v565 = vpop.f32.mrf.mxu0
    %v566 = vadd.f32 0.0, %v565
    %v567 = vpop.f32.mrf.mxu0
    %v568 = vadd.f32 0.0, %v567
    %569 = vmatmul.bf16.gmra.mxu0 %v396
    %v570 = vpop.f32.mrf.mxu0
    %v571 = vadd.f32 0.0, %v570
    %v572 = vpop.f32.mrf.mxu0
    %v573 = vadd.f32 0.0, %v572
    %574 = vmatmul.bf16.gmra.mxu0 %v399
    %v575 = vpop.f32.mrf.mxu0
    %v576 = vadd.f32 0.0, %v575
    %v577 = vpop.f32.mrf.mxu0
    %v578 = vadd.f32 0.0, %v577
    %579 = vmatmul.bf16.gmra.mxu0 %v402
    %v580 = vpop.f32.mrf.mxu0
    %v581 = vadd.f32 0.0, %v580
    %v582 = vpop.f32.mrf.mxu0
    %v583 = vadd.f32 0.0, %v582
    %584 = vmatmul.bf16.gmra.mxu0 %v405
    %v585 = vpop.f32.mrf.mxu0
    %v586 = vadd.f32 0.0, %v585
    %v587 = vpop.f32.mrf.mxu0
    %v588 = vadd.f32 0.0, %v587
    %589 = vmatmul.bf16.gmra.mxu0 %v408
    %v590 = vpop.f32.mrf.mxu0
    %v591 = vadd.f32 0.0, %v590
    %v592 = vpop.f32.mrf.mxu0
    %v593 = vadd.f32 0.0, %v592
    %594 = vmatmul.bf16.gmra.mxu0 %v411
    %v595 = vpop.f32.mrf.mxu0
    %v596 = vadd.f32 0.0, %v595
    %v597 = vpop.f32.mrf.mxu0
    %v598 = vadd.f32 0.0, %v597
    %599 = vmatmul.bf16.gmra.mxu0 %v414
    %v600 = vpop.f32.mrf.mxu0
    %v601 = vadd.f32 0.0, %v600
    %v602 = vpop.f32.mrf.mxu0
    %v603 = vadd.f32 0.0, %v602
    %604 = vmatmul.bf16.gmra.mxu0 %v417
    %v605 = vpop.f32.mrf.mxu0
    %v606 = vadd.f32 0.0, %v605
    %v607 = vpop.f32.mrf.mxu0
    %v608 = vadd.f32 0.0, %v607
    %609 = vmatmul.bf16.gmra.mxu0 %v420
    %v610 = vpop.f32.mrf.mxu0
    %v611 = vadd.f32 0.0, %v610
    %v612 = vpop.f32.mrf.mxu0
    %v613 = vadd.f32 0.0, %v612
    %614 = vmatmul.bf16.gmra.mxu0 %v423
    %v615 = vpop.f32.mrf.mxu0
    %v616 = vadd.f32 0.0, %v615
    %v617 = vpop.f32.mrf.mxu0
    %v618 = vadd.f32 0.0, %v617
    %619 = vmatmul.bf16.gmra.mxu0 %v426
    %v620 = vpop.f32.mrf.mxu0
    %v621 = vadd.f32 0.0, %v620
    %v622 = vpop.f32.mrf.mxu0
    %v623 = vadd.f32 0.0, %v622
    %624 = vmatmul.bf16.gmra.mxu0 %v429
    %v625 = vpop.f32.mrf.mxu0
    %v626 = vadd.f32 0.0, %v625
    %v627 = vpop.f32.mrf.mxu0
    %v628 = vadd.f32 0.0, %v627
    %629 = vmatmul.bf16.gmra.mxu0 %v432
    %v630 = vpop.f32.mrf.mxu0
    %v631 = vadd.f32 0.0, %v630
    %v632 = vpop.f32.mrf.mxu0
    %v633 = vadd.f32 0.0, %v632
    %634 = vmatmul.bf16.gmra.mxu0 %v435
    %v635 = vpop.f32.mrf.mxu0
    %v636 = vadd.f32 0.0, %v635
    %v637 = vpop.f32.mrf.mxu0
    %v638 = vadd.f32 0.0, %v637
    %639 = vmatmul.bf16.gmra.mxu0 %v438
    %v640 = vpop.f32.mrf.mxu0
    %v641 = vadd.f32 0.0, %v640
    %v642 = vpop.f32.mrf.mxu0
    %v643 = vadd.f32 0.0, %v642
    %644 = vmatmul.bf16.gmra.mxu0 %v441
    %v645 = vpop.f32.mrf.mxu0
    %v646 = vadd.f32 0.0, %v645
    %v647 = vpop.f32.mrf.mxu0
    %v648 = vadd.f32 0.0, %v647
    %649 = vmatmul.bf16.gmra.mxu0 %v444
    %v650 = vpop.f32.mrf.mxu0
    %v651 = vadd.f32 0.0, %v650
    %v652 = vpop.f32.mrf.mxu0
    %v653 = vadd.f32 0.0, %v652
    %654 = vmatmul.bf16.gmra.mxu0 %v447
    %v655 = vpop.f32.mrf.mxu0
    %v656 = vadd.f32 0.0, %v655
    %v657 = vpop.f32.mrf.mxu0
    %v658 = vadd.f32 0.0, %v657
    %659 = vmatmul.bf16.gmra.mxu0 %v450
    %v660 = vpop.f32.mrf.mxu0
    %v661 = vadd.f32 0.0, %v660
    %v662 = vpop.f32.mrf.mxu0
    %v663 = vadd.f32 0.0, %v662
    %664 = vmatmul.bf16.gmra.mxu0 %v453
    %v665 = vpop.f32.mrf.mxu0
    %v666 = vadd.f32 0.0, %v665
    %v667 = vpop.f32.mrf.mxu0
    %v668 = vadd.f32 0.0, %v667
    %669 = vmatmul.bf16.gmra.mxu0 %v456
    %v670 = vpop.f32.mrf.mxu0
    %v671 = vadd.f32 0.0, %v670
    %v672 = vpop.f32.mrf.mxu0
    %v673 = vadd.f32 0.0, %v672
    %674 = vmatmul.bf16.gmra.mxu0 %v459
    %v675 = vpop.f32.mrf.mxu0
    %v676 = vadd.f32 0.0, %v675
    %v677 = vpop.f32.mrf.mxu0
    %v678 = vadd.f32 0.0, %v677
    %679 = vmatmul.bf16.gmra.mxu0 %v462
    %v680 = vpop.f32.mrf.mxu0
    %v681 = vadd.f32 0.0, %v680
    %v682 = vpop.f32.mrf.mxu0
    %v683 = vadd.f32 0.0, %v682
    %684 = vmatmul.bf16.gmra.mxu0 %v465
    %v685 = vpop.f32.mrf.mxu0
    %v686 = vadd.f32 0.0, %v685
    %v687 = vpop.f32.mrf.mxu0
    %v688 = vadd.f32 0.0, %v687
    %689 = vmatmul.bf16.gmra.mxu0 %v468
    %v690 = vpop.f32.mrf.mxu0
    %v691 = vadd.f32 0.0, %v690
    %v692 = vpop.f32.mrf.mxu0
    %v693 = vadd.f32 0.0, %v692
    %694 = vmatmul.bf16.gmra.mxu0 %v471
    %v695 = vpop.f32.mrf.mxu0
    %v696 = vadd.f32 0.0, %v695
    %v697 = vpop.f32.mrf.mxu0
    %v698 = vadd.f32 0.0, %v697
    %699 = vmatmul.bf16.gmra.mxu0 %v474
    %v700 = vpop.f32.mrf.mxu0
    %v701 = vadd.f32 0.0, %v700
    %v702 = vpop.f32.mrf.mxu0
    %v703 = vadd.f32 0.0, %v702
    %704 = vmatmul.bf16.gmra.mxu0 %v477
    %v705 = vpop.f32.mrf.mxu0
    %v706 = vadd.f32 0.0, %v705
    %v707 = vpop.f32.mrf.mxu0
    %v708 = vadd.f32 0.0, %v707
    %709 = vmatmul.bf16.gmra.mxu0 %v480
    %v710 = vpop.f32.mrf.mxu0
    %v711 = vadd.f32 0.0, %v710
    %v712 = vpop.f32.mrf.mxu0
    %v713 = vadd.f32 0.0, %v712
    %714 = vmatmul.bf16.gmra.mxu0 %v483
    %v715 = vpop.f32.mrf.mxu0
    %v716 = vadd.f32 0.0, %v715
    %v717 = vpop.f32.mrf.mxu0
    %v718 = vadd.f32 0.0, %v717
    %719 = vmatmul.bf16.gmra.mxu0 %v486
    %v720 = vpop.f32.mrf.mxu0
    %v721 = vadd.f32 0.0, %v720
    %v722 = vpop.f32.mrf.mxu0
    %v723 = vadd.f32 0.0, %v722
    %724 = vmatmul.bf16.gmra.mxu0 %v489
    %v725 = vpop.f32.mrf.mxu0
    %v726 = vadd.f32 0.0, %v725
    %v727 = vpop.f32.mrf.mxu0
    %v728 = vadd.f32 0.0, %v727
    %729 = vmatmul.bf16.gmra.mxu0 %v492
    %v730 = vpop.f32.mrf.mxu0
    %v731 = vadd.f32 0.0, %v730
    %v732 = vpop.f32.mrf.mxu0
    %v733 = vadd.f32 0.0, %v732
    %734 = vmatmul.bf16.gmra.mxu0 %v495
    %v735 = vpop.f32.mrf.mxu0
    %v736 = vadd.f32 0.0, %v735
    %v737 = vpop.f32.mrf.mxu0
    %v738 = vadd.f32 0.0, %v737
    %739 = vmatmul.bf16.gmra.mxu0 %v498
    %v740 = vpop.f32.mrf.mxu0
    %v741 = vadd.f32 0.0, %v740
    %v742 = vpop.f32.mrf.mxu0
    %v743 = vadd.f32 0.0, %v742
    %744 = vmatmul.bf16.gmra.mxu0 %v501
    %v745 = vpop.f32.mrf.mxu0
    %v746 = vadd.f32 0.0, %v745
    %v747 = vpop.f32.mrf.mxu0
    %v748 = vadd.f32 0.0, %v747
    %749 = vmatmul.bf16.gmra.mxu0 %v504
    %v750 = vpop.f32.mrf.mxu0
    %v751 = vadd.f32 0.0, %v750
    %v752 = vpop.f32.mrf.mxu0
    %v753 = vadd.f32 0.0, %v752
    %754 = vmatmul.bf16.gmra.mxu0 %v507
    %v755 = vpop.f32.mrf.mxu0
    %v756 = vadd.f32 0.0, %v755
    %v757 = vpop.f32.mrf.mxu0
    %v758 = vadd.f32 0.0, %v757
    %759 = vmatmul.bf16.gmra.mxu0 %v510
    %v760 = vpop.f32.mrf.mxu0
    %v761 = vadd.f32 0.0, %v760
    %v762 = vpop.f32.mrf.mxu0
    %v763 = vadd.f32 0.0, %v762
    %764 = vdwg.mxu0
    %v765 = vpack.c.bf16 %v528, %v526
    %v766 = vpack.c.bf16 %v533, %v531
    %v767 = vpack.c.bf16 %v538, %v536
    %v768 = vpack.c.bf16 %v543, %v541
    %v769 = vpack.c.bf16 %v548, %v546
    %v770 = vpack.c.bf16 %v553, %v551
    %v771 = vpack.c.bf16 %v558, %v556
    %v772 = vpack.c.bf16 %v563, %v561
    %v773 = vpack.c.bf16 %v568, %v566
    %v774 = vpack.c.bf16 %v573, %v571
    %v775 = vpack.c.bf16 %v578, %v576
    %v776 = vpack.c.bf16 %v583, %v581
    %v777 = vpack.c.bf16 %v588, %v586
    %v778 = vpack.c.bf16 %v593, %v591
    %v779 = vpack.c.bf16 %v598, %v596
    %v780 = vpack.c.bf16 %v603, %v601
    %v781 = vpack.c.bf16 %v608, %v606
    %v782 = vpack.c.bf16 %v613, %v611
    %v783 = vpack.c.bf16 %v618, %v616
    %v784 = vpack.c.bf16 %v623, %v621
    %v785 = vpack.c.bf16 %v628, %v626
    %v786 = vpack.c.bf16 %v633, %v631
    %v787 = vpack.c.bf16 %v638, %v636
    %v788 = vpack.c.bf16 %v643, %v641
    %v789 = vpack.c.bf16 %v648, %v646
    %v790 = vpack.c.bf16 %v653, %v651
    %v791 = vpack.c.bf16 %v658, %v656
    %v792 = vpack.c.bf16 %v663, %v661
    %v793 = vpack.c.bf16 %v668, %v666
    %v794 = vpack.c.bf16 %v673, %v671
    %v795 = vpack.c.bf16 %v678, %v676
    %v796 = vpack.c.bf16 %v683, %v681
    %v797 = vpack.c.bf16 %v688, %v686
    %v798 = vpack.c.bf16 %v693, %v691
    %v799 = vpack.c.bf16 %v698, %v696
    %v800 = vpack.c.bf16 %v703, %v701
    %v801 = vpack.c.bf16 %v708, %v706
    %v802 = vpack.c.bf16 %v713, %v711
    %v803 = vpack.c.bf16 %v718, %v716
    %v804 = vpack.c.bf16 %v723, %v721
    %v805 = vpack.c.bf16 %v728, %v726
    %v806 = vpack.c.bf16 %v733, %v731
    %v807 = vpack.c.bf16 %v738, %v736
    %v808 = vpack.c.bf16 %v743, %v741
    %v809 = vpack.c.bf16 %v748, %v746
    %v810 = vpack.c.bf16 %v753, %v751
    %v811 = vpack.c.bf16 %v758, %v756
    %v812 = vpack.c.bf16 %v763, %v761
    %v813 = vunpack.c.l.bf16 %v765
    %v814 = vunpack.c.h.bf16 %v765
    %v815 = vunpack.c.l.bf16 %v766
    %v816 = vunpack.c.h.bf16 %v766
    %v817 = vunpack.c.l.bf16 %v767
    %v818 = vunpack.c.h.bf16 %v767
    %v819 = vunpack.c.l.bf16 %v768
    %v820 = vunpack.c.h.bf16 %v768
    %v821 = vunpack.c.l.bf16 %v769
    %v822 = vunpack.c.h.bf16 %v769
    %v823 = vunpack.c.l.bf16 %v770
    %v824 = vunpack.c.h.bf16 %v770
    %v825 = vunpack.c.l.bf16 %v771
    %v826 = vunpack.c.h.bf16 %v771
    %v827 = vunpack.c.l.bf16 %v772
    %v828 = vunpack.c.h.bf16 %v772
    %v829 = vunpack.c.l.bf16 %v773
    %v830 = vunpack.c.h.bf16 %v773
    %v831 = vunpack.c.l.bf16 %v774
    %v832 = vunpack.c.h.bf16 %v774
    %v833 = vunpack.c.l.bf16 %v775
    %v834 = vunpack.c.h.bf16 %v775
    %v835 = vunpack.c.l.bf16 %v776
    %v836 = vunpack.c.h.bf16 %v776
    %v837 = vunpack.c.l.bf16 %v777
    %v838 = vunpack.c.h.bf16 %v777
    %v839 = vunpack.c.l.bf16 %v778
    %v840 = vunpack.c.h.bf16 %v778
    %v841 = vunpack.c.l.bf16 %v779
    %v842 = vunpack.c.h.bf16 %v779
    %v843 = vunpack.c.l.bf16 %v780
    %v844 = vunpack.c.h.bf16 %v780
    %v845 = vunpack.c.l.bf16 %v781
    %v846 = vunpack.c.h.bf16 %v781
    %v847 = vunpack.c.l.bf16 %v782
    %v848 = vunpack.c.h.bf16 %v782
    %v849 = vunpack.c.l.bf16 %v783
    %v850 = vunpack.c.h.bf16 %v783
    %v851 = vunpack.c.l.bf16 %v784
    %v852 = vunpack.c.h.bf16 %v784
    %v853 = vunpack.c.l.bf16 %v785
    %v854 = vunpack.c.h.bf16 %v785
    %v855 = vunpack.c.l.bf16 %v786
    %v856 = vunpack.c.h.bf16 %v786
    %v857 = vunpack.c.l.bf16 %v787
    %v858 = vunpack.c.h.bf16 %v787
    %v859 = vunpack.c.l.bf16 %v788
    %v860 = vunpack.c.h.bf16 %v788
    %v861 = vunpack.c.l.bf16 %v789
    %v862 = vunpack.c.h.bf16 %v789
    %v863 = vunpack.c.l.bf16 %v790
    %v864 = vunpack.c.h.bf16 %v790
    %v865 = vunpack.c.l.bf16 %v791
    %v866 = vunpack.c.h.bf16 %v791
    %v867 = vunpack.c.l.bf16 %v792
    %v868 = vunpack.c.h.bf16 %v792
    %v869 = vunpack.c.l.bf16 %v793
    %v870 = vunpack.c.h.bf16 %v793
    %v871 = vunpack.c.l.bf16 %v794
    %v872 = vunpack.c.h.bf16 %v794
    %v873 = vunpack.c.l.bf16 %v795
    %v874 = vunpack.c.h.bf16 %v795
    %v875 = vunpack.c.l.bf16 %v796
    %v876 = vunpack.c.h.bf16 %v796
    %v877 = vunpack.c.l.bf16 %v797
    %v878 = vunpack.c.h.bf16 %v797
    %v879 = vunpack.c.l.bf16 %v798
    %v880 = vunpack.c.h.bf16 %v798
    %v881 = vunpack.c.l.bf16 %v799
    %v882 = vunpack.c.h.bf16 %v799
    %v883 = vunpack.c.l.bf16 %v800
    %v884 = vunpack.c.h.bf16 %v800
    %v885 = vunpack.c.l.bf16 %v801
    %v886 = vunpack.c.h.bf16 %v801
    %v887 = vunpack.c.l.bf16 %v802
    %v888 = vunpack.c.h.bf16 %v802
    %v889 = vunpack.c.l.bf16 %v803
    %v890 = vunpack.c.h.bf16 %v803
    %v891 = vunpack.c.l.bf16 %v804
    %v892 = vunpack.c.h.bf16 %v804
    %v893 = vunpack.c.l.bf16 %v805
    %v894 = vunpack.c.h.bf16 %v805
    %v895 = vunpack.c.l.bf16 %v806
    %v896 = vunpack.c.h.bf16 %v806
    %v897 = vunpack.c.l.bf16 %v807
    %v898 = vunpack.c.h.bf16 %v807
    %v899 = vunpack.c.l.bf16 %v808
    %v900 = vunpack.c.h.bf16 %v808
    %v901 = vunpack.c.l.bf16 %v809
    %v902 = vunpack.c.h.bf16 %v809
    %v903 = vunpack.c.l.bf16 %v810
    %v904 = vunpack.c.h.bf16 %v810
    %v905 = vunpack.c.l.bf16 %v811
    %v906 = vunpack.c.h.bf16 %v811
    %v907 = vunpack.c.l.bf16 %v812
    %v908 = vunpack.c.h.bf16 %v812
    %v909 = vtanh.pop %v813
    %v910 = vtanh.pop %v814
    %v911 = vtanh.pop %v815
    %v912 = vtanh.pop %v816
    %v913 = vtanh.pop %v817
    %v914 = vtanh.pop %v818
    %v915 = vtanh.pop %v819
    %v916 = vtanh.pop %v820
    %v917 = vtanh.pop %v821
    %v918 = vtanh.pop %v822
    %v919 = vtanh.pop %v823
    %v920 = vtanh.pop %v824
    %v921 = vtanh.pop %v825
    %v922 = vtanh.pop %v826
    %v923 = vtanh.pop %v827
    %v924 = vtanh.pop %v828
    %v925 = vtanh.pop %v829
    %v926 = vtanh.pop %v830
    %v927 = vtanh.pop %v831
    %v928 = vtanh.pop %v832
    %v929 = vtanh.pop %v833
    %v930 = vtanh.pop %v834
    %v931 = vtanh.pop %v835
    %v932 = vtanh.pop %v836
    %v933 = vtanh.pop %v837
    %v934 = vtanh.pop %v838
    %v935 = vtanh.pop %v839
    %v936 = vtanh.pop %v840
    %v937 = vtanh.pop %v841
    %v938 = vtanh.pop %v842
    %v939 = vtanh.pop %v843
    %v940 = vtanh.pop %v844
    %v941 = vtanh.pop %v845
    %v942 = vtanh.pop %v846
    %v943 = vtanh.pop %v847
    %v944 = vtanh.pop %v848
    %v945 = vtanh.pop %v849
    %v946 = vtanh.pop %v850
    %v947 = vtanh.pop %v851
    %v948 = vtanh.pop %v852
    %v949 = vtanh.pop %v853
    %v950 = vtanh.pop %v854
    %v951 = vtanh.pop %v855
    %v952 = vtanh.pop %v856
    %v953 = vtanh.pop %v857
    %v954 = vtanh.pop %v858
    %v955 = vtanh.pop %v859
    %v956 = vtanh.pop %v860
    %v957 = vtanh.pop %v861
    %v958 = vtanh.pop %v862
    %v959 = vtanh.pop %v863
    %v960 = vtanh.pop %v864
    %v961 = vtanh.pop %v865
    %v962 = vtanh.pop %v866
    %v963 = vtanh.pop %v867
    %v964 = vtanh.pop %v868
    %v965 = vtanh.pop %v869
    %v966 = vtanh.pop %v870
    %v967 = vtanh.pop %v871
    %v968 = vtanh.pop %v872
    %v969 = vtanh.pop %v873
    %v970 = vtanh.pop %v874
    %v971 = vtanh.pop %v875
    %v972 = vtanh.pop %v876
    %v973 = vtanh.pop %v877
    %v974 = vtanh.pop %v878
    %v975 = vtanh.pop %v879
    %v976 = vtanh.pop %v880
    %v977 = vtanh.pop %v881
    %v978 = vtanh.pop %v882
    %v979 = vtanh.pop %v883
    %v980 = vtanh.pop %v884
    %v981 = vtanh.pop %v885
    %v982 = vtanh.pop %v886
    %v983 = vtanh.pop %v887
    %v984 = vtanh.pop %v888
    %v985 = vtanh.pop %v889
    %v986 = vtanh.pop %v890
    %v987 = vtanh.pop %v891
    %v988 = vtanh.pop %v892
    %v989 = vtanh.pop %v893
    %v990 = vtanh.pop %v894
    %v991 = vtanh.pop %v895
    %v992 = vtanh.pop %v896
    %v993 = vtanh.pop %v897
    %v994 = vtanh.pop %v898
    %v995 = vtanh.pop %v899
    %v996 = vtanh.pop %v900
    %v997 = vtanh.pop %v901
    %v998 = vtanh.pop %v902
    %v999 = vtanh.pop %v903
    %v1000 = vtanh.pop %v904
    %v1001 = vtanh.pop %v905
    %v1002 = vtanh.pop %v906
    %v1003 = vtanh.pop %v907
    %v1004 = vtanh.pop %v908
    %v1005 = vpack.c.bf16 %v910, %v909
    %v1006 = vpack.c.bf16 %v912, %v911
    %v1007 = vpack.c.bf16 %v914, %v913
    %v1008 = vpack.c.bf16 %v916, %v915
    %v1009 = vpack.c.bf16 %v918, %v917
    %v1010 = vpack.c.bf16 %v920, %v919
    %v1011 = vpack.c.bf16 %v922, %v921
    %v1012 = vpack.c.bf16 %v924, %v923
    %v1013 = vpack.c.bf16 %v926, %v925
    %v1014 = vpack.c.bf16 %v928, %v927
    %v1015 = vpack.c.bf16 %v930, %v929
    %v1016 = vpack.c.bf16 %v932, %v931
    %v1017 = vpack.c.bf16 %v934, %v933
    %v1018 = vpack.c.bf16 %v936, %v935
    %v1019 = vpack.c.bf16 %v938, %v937
    %v1020 = vpack.c.bf16 %v940, %v939
    %v1021 = vpack.c.bf16 %v942, %v941
    %v1022 = vpack.c.bf16 %v944, %v943
    %v1023 = vpack.c.bf16 %v946, %v945
    %v1024 = vpack.c.bf16 %v948, %v947
    %v1025 = vpack.c.bf16 %v950, %v949
    %v1026 = vpack.c.bf16 %v952, %v951
    %v1027 = vpack.c.bf16 %v954, %v953
    %v1028 = vpack.c.bf16 %v956, %v955
    %v1029 = vpack.c.bf16 %v958, %v957
    %v1030 = vpack.c.bf16 %v960, %v959
    %v1031 = vpack.c.bf16 %v962, %v961
    %v1032 = vpack.c.bf16 %v964, %v963
    %v1033 = vpack.c.bf16 %v966, %v965
    %v1034 = vpack.c.bf16 %v968, %v967
    %v1035 = vpack.c.bf16 %v970, %v969
    %v1036 = vpack.c.bf16 %v972, %v971
    %v1037 = vpack.c.bf16 %v974, %v973
    %v1038 = vpack.c.bf16 %v976, %v975
    %v1039 = vpack.c.bf16 %v978, %v977
    %v1040 = vpack.c.bf16 %v980, %v979
    %v1041 = vpack.c.bf16 %v982, %v981
    %v1042 = vpack.c.bf16 %v984, %v983
    %v1043 = vpack.c.bf16 %v986, %v985
    %v1044 = vpack.c.bf16 %v988, %v987
    %v1045 = vpack.c.bf16 %v990, %v989
    %v1046 = vpack.c.bf16 %v992, %v991
    %v1047 = vpack.c.bf16 %v994, %v993
    %v1048 = vpack.c.bf16 %v996, %v995
    %v1049 = vpack.c.bf16 %v998, %v997
    %v1050 = vpack.c.bf16 %v1000, %v999
    %v1051 = vpack.c.bf16 %v1002, %v1001
    %v1052 = vpack.c.bf16 %v1004, %v1003
    %v1053 = vld [vmem:[%s3] sm:$0xff]
    %v1054 = vld [vmem:[%s3 + $0x8] sm:$0xff]
    %v1055 = vld [vmem:[%s3 + $0x10] sm:$0xff]
    %v1056 = vld [vmem:[%s3 + $0x18] sm:$0xff]
    %v1057 = vld [vmem:[%s3 + $0x20] sm:$0xff]
    %v1058 = vld [vmem:[%s3 + $0x28] sm:$0xff]
    %v1059 = vld [vmem:[%s3 + $0x30] sm:$0xff]
    %v1060 = vld [vmem:[%s3 + $0x38] sm:$0xff]
    %v1061 = vld [vmem:[%s3 + $0x40] sm:$0xff]
    %v1062 = vld [vmem:[%s3 + $0x48] sm:$0xff]
    %v1063 = vld [vmem:[%s3 + $0x50] sm:$0xff]
    %v1064 = vld [vmem:[%s3 + $0x58] sm:$0xff]
    %v1065 = vld [vmem:[%s3 + $0x60] sm:$0xff]
    %v1066 = vld [vmem:[%s3 + $0x68] sm:$0xff]
    %v1067 = vld [vmem:[%s3 + $0x70] sm:$0xff]
    %v1068 = vld [vmem:[%s3 + $0x78] sm:$0xff]
    %v1069 = vld [vmem:[%s3 + $0x80] sm:$0xff]
    %v1070 = vld [vmem:[%s3 + $0x88] sm:$0xff]
    %v1071 = vld [vmem:[%s3 + $0x90] sm:$0xff]
    %v1072 = vld [vmem:[%s3 + $0x98] sm:$0xff]
    %v1073 = vld [vmem:[%s3 + $0xa0] sm:$0xff]
    %v1074 = vld [vmem:[%s3 + $0xa8] sm:$0xff]
    %v1075 = vld [vmem:[%s3 + $0xb0] sm:$0xff]
    %v1076 = vld [vmem:[%s3 + $0xb8] sm:$0xff]
    %v1077 = vld [vmem:[%s3 + $0xc0] sm:$0xff]
    %v1078 = vld [vmem:[%s3 + $0xc8] sm:$0xff]
    %v1079 = vld [vmem:[%s3 + $0xd0] sm:$0xff]
    %v1080 = vld [vmem:[%s3 + $0xd8] sm:$0xff]
    %v1081 = vld [vmem:[%s3 + $0xe0] sm:$0xff]
    %v1082 = vld [vmem:[%s3 + $0xe8] sm:$0xff]
    %v1083 = vld [vmem:[%s3 + $0xf0] sm:$0xff]
    %v1084 = vld [vmem:[%s3 + $0xf8] sm:$0xff]
    %v1085 = vld [vmem:[%s3 + $0x100] sm:$0xff]
    %v1086 = vld [vmem:[%s3 + $0x108] sm:$0xff]
    %v1087 = vld [vmem:[%s3 + $0x110] sm:$0xff]
    %v1088 = vld [vmem:[%s3 + $0x118] sm:$0xff]
    %v1089 = vld [vmem:[%s3 + $0x120] sm:$0xff]
    %v1090 = vld [vmem:[%s3 + $0x128] sm:$0xff]
    %v1091 = vld [vmem:[%s3 + $0x130] sm:$0xff]
    %v1092 = vld [vmem:[%s3 + $0x138] sm:$0xff]
    %v1093 = vld [vmem:[%s3 + $0x140] sm:$0xff]
    %v1094 = vld [vmem:[%s3 + $0x148] sm:$0xff]
    %v1095 = vld [vmem:[%s3 + $0x150] sm:$0xff]
    %v1096 = vld [vmem:[%s3 + $0x158] sm:$0xff]
    %v1097 = vld [vmem:[%s3 + $0x160] sm:$0xff]
    %v1098 = vld [vmem:[%s3 + $0x168] sm:$0xff]
    %v1099 = vld [vmem:[%s3 + $0x170] sm:$0xff]
    %v1100 = vld [vmem:[%s3 + $0x178] sm:$0xff]
    %v1101 = vld [vmem:[%s3 + $0x180] sm:$0xff]
    %v1102 = vld [vmem:[%s3 + $0x188] sm:$0xff]
    %v1103 = vld [vmem:[%s3 + $0x190] sm:$0xff]
    %v1104 = vld [vmem:[%s3 + $0x198] sm:$0xff]
    %v1105 = vld [vmem:[%s3 + $0x1a0] sm:$0xff]
    %v1106 = vld [vmem:[%s3 + $0x1a8] sm:$0xff]
    %v1107 = vld [vmem:[%s3 + $0x1b0] sm:$0xff]
    %v1108 = vld [vmem:[%s3 + $0x1b8] sm:$0xff]
    %v1109 = vld [vmem:[%s3 + $0x1c0] sm:$0xff]
    %v1110 = vld [vmem:[%s3 + $0x1c8] sm:$0xff]
    %v1111 = vld [vmem:[%s3 + $0x1d0] sm:$0xff]
    %v1112 = vld [vmem:[%s3 + $0x1d8] sm:$0xff]
    %v1113 = vld [vmem:[%s4] sm:$0xff]
    %v1114 = vld [vmem:[%s4 + $0x8] sm:$0xff]
    %v1115 = vld [vmem:[%s4 + $0x10] sm:$0xff]
    %v1116 = vld [vmem:[%s4 + $0x18] sm:$0xff]
    %v1117 = vld [vmem:[%s4 + $0x20] sm:$0xff]
    %v1118 = vld [vmem:[%s4 + $0x28] sm:$0xff]
    %v1119 = vld [vmem:[%s4 + $0x30] sm:$0xff]
    %v1120 = vld [vmem:[%s4 + $0x38] sm:$0xff]
    %v1121 = vld [vmem:[%s4 + $0x40] sm:$0xff]
    %v1122 = vld [vmem:[%s4 + $0x48] sm:$0xff]
    %v1123 = vld [vmem:[%s4 + $0x50] sm:$0xff]
    %v1124 = vld [vmem:[%s4 + $0x58] sm:$0xff]
    %v1125 = vld [vmem:[%s4 + $0x60] sm:$0xff]
    %v1126 = vld [vmem:[%s4 + $0x68] sm:$0xff]
    %v1127 = vld [vmem:[%s4 + $0x70] sm:$0xff]
    %v1128 = vld [vmem:[%s4 + $0x78] sm:$0xff]
    %v1129 = vld [vmem:[%s4 + $0x80] sm:$0xff]
    %v1130 = vld [vmem:[%s4 + $0x88] sm:$0xff]
    %v1131 = vld [vmem:[%s4 + $0x90] sm:$0xff]
    %v1132 = vld [vmem:[%s4 + $0x98] sm:$0xff]
    %1134 = vset.pattern.permute.xlu0 0
    %1135 = vperm.xlu0 %1134, %v1113
    %v1136 = vpop.permute.xlu0 %1135
    %1139 = vset.pattern.permute.xlu0 0
    %1140 = vperm.xlu0 %1139, %v1114
    %v1141 = vpop.permute.xlu0 %1140
    %1144 = vset.pattern.permute.xlu0 0
    %1145 = vperm.xlu0 %1144, %v1115
    %v1146 = vpop.permute.xlu0 %1145
    %1149 = vset.pattern.permute.xlu0 0
    %1150 = vperm.xlu0 %1149, %v1116
    %v1151 = vpop.permute.xlu0 %1150
    %1154 = vset.pattern.permute.xlu0 0
    %1155 = vperm.xlu0 %1154, %v1117
    %v1156 = vpop.permute.xlu0 %1155
    %1159 = vset.pattern.permute.xlu0 0
    %1160 = vperm.xlu0 %1159, %v1118
    %v1161 = vpop.permute.xlu0 %1160
    %1164 = vset.pattern.permute.xlu0 0
    %1165 = vperm.xlu0 %1164, %v1119
    %v1166 = vpop.permute.xlu0 %1165
    %1169 = vset.pattern.permute.xlu0 0
    %1170 = vperm.xlu0 %1169, %v1120
    %v1171 = vpop.permute.xlu0 %1170
    %1174 = vset.pattern.permute.xlu0 0
    %1175 = vperm.xlu0 %1174, %v1121
    %v1176 = vpop.permute.xlu0 %1175
    %1179 = vset.pattern.permute.xlu0 0
    %1180 = vperm.xlu0 %1179, %v1122
    %v1181 = vpop.permute.xlu0 %1180
    %1184 = vset.pattern.permute.xlu0 0
    %1185 = vperm.xlu0 %1184, %v1123
    %v1186 = vpop.permute.xlu0 %1185
    %1189 = vset.pattern.permute.xlu0 0
    %1190 = vperm.xlu0 %1189, %v1124
    %v1191 = vpop.permute.xlu0 %1190
    %1194 = vset.pattern.permute.xlu0 0
    %1195 = vperm.xlu0 %1194, %v1125
    %v1196 = vpop.permute.xlu0 %1195
    %1199 = vset.pattern.permute.xlu0 0
    %1200 = vperm.xlu0 %1199, %v1126
    %v1201 = vpop.permute.xlu0 %1200
    %1204 = vset.pattern.permute.xlu0 0
    %1205 = vperm.xlu0 %1204, %v1127
    %v1206 = vpop.permute.xlu0 %1205
    %1209 = vset.pattern.permute.xlu0 0
    %1210 = vperm.xlu0 %1209, %v1128
    %v1211 = vpop.permute.xlu0 %1210
    %1214 = vset.pattern.permute.xlu0 0
    %1215 = vperm.xlu0 %1214, %v1129
    %v1216 = vpop.permute.xlu0 %1215
    %1219 = vset.pattern.permute.xlu0 0
    %1220 = vperm.xlu0 %1219, %v1130
    %v1221 = vpop.permute.xlu0 %1220
    %1224 = vset.pattern.permute.xlu0 0
    %1225 = vperm.xlu0 %1224, %v1131
    %v1226 = vpop.permute.xlu0 %1225
    %1229 = vset.pattern.permute.xlu0 0
    %1230 = vperm.xlu0 %1229, %v1132
    %v1231 = vpop.permute.xlu0 %1230
    %v1293 = vunpack.c.l.b16 %v1053
    %v1294 = vunpack.c.h.b16 %v1053
    %v1295 = vunpack.c.l.b16 %v1054
    %v1296 = vunpack.c.h.b16 %v1054
    %v1297 = vunpack.c.l.b16 %v1055
    %v1298 = vunpack.c.h.b16 %v1055
    %v1299 = vunpack.c.l.b16 %v1056
    %v1300 = vunpack.c.h.b16 %v1056
    %v1301 = vunpack.c.l.b16 %v1057
    %v1302 = vunpack.c.h.b16 %v1057
    %v1303 = vunpack.c.l.b16 %v1058
    %v1304 = vunpack.c.h.b16 %v1058
    %v1305 = vunpack.c.l.b16 %v1059
    %v1306 = vunpack.c.h.b16 %v1059
    %v1307 = vunpack.c.l.b16 %v1060
    %v1308 = vunpack.c.h.b16 %v1060
    %v1309 = vunpack.c.l.b16 %v1061
    %v1310 = vunpack.c.h.b16 %v1061
    %v1311 = vunpack.c.l.b16 %v1062
    %v1312 = vunpack.c.h.b16 %v1062
    %v1313 = vunpack.c.l.b16 %v1063
    %v1314 = vunpack.c.h.b16 %v1063
    %v1315 = vunpack.c.l.b16 %v1064
    %v1316 = vunpack.c.h.b16 %v1064
    %v1317 = vunpack.c.l.b16 %v1065
    %v1318 = vunpack.c.h.b16 %v1065
    %v1319 = vunpack.c.l.b16 %v1066
    %v1320 = vunpack.c.h.b16 %v1066
    %v1321 = vunpack.c.l.b16 %v1067
    %v1322 = vunpack.c.h.b16 %v1067
    %v1323 = vunpack.c.l.b16 %v1068
    %v1324 = vunpack.c.h.b16 %v1068
    %v1325 = vunpack.c.l.b16 %v1069
    %v1326 = vunpack.c.h.b16 %v1069
    %v1327 = vunpack.c.l.b16 %v1070
    %v1328 = vunpack.c.h.b16 %v1070
    %v1329 = vunpack.c.l.b16 %v1071
    %v1330 = vunpack.c.h.b16 %v1071
    %v1331 = vunpack.c.l.b16 %v1072
    %v1332 = vunpack.c.h.b16 %v1072
    %v1333 = vunpack.c.l.b16 %v1073
    %v1334 = vunpack.c.h.b16 %v1073
    %v1335 = vunpack.c.l.b16 %v1074
    %v1336 = vunpack.c.h.b16 %v1074
    %v1337 = vunpack.c.l.b16 %v1075
    %v1338 = vunpack.c.h.b16 %v1075
    %v1339 = vunpack.c.l.b16 %v1076
    %v1340 = vunpack.c.h.b16 %v1076
    %v1341 = vunpack.c.l.b16 %v1077
    %v1342 = vunpack.c.h.b16 %v1077
    %v1343 = vunpack.c.l.b16 %v1078
    %v1344 = vunpack.c.h.b16 %v1078
    %v1345 = vunpack.c.l.b16 %v1079
    %v1346 = vunpack.c.h.b16 %v1079
    %v1347 = vunpack.c.l.b16 %v1080
    %v1348 = vunpack.c.h.b16 %v1080
    %v1349 = vunpack.c.l.b16 %v1081
    %v1350 = vunpack.c.h.b16 %v1081
    %v1351 = vunpack.c.l.b16 %v1082
    %v1352 = vunpack.c.h.b16 %v1082
    %v1353 = vunpack.c.l.b16 %v1083
    %v1354 = vunpack.c.h.b16 %v1083
    %v1355 = vunpack.c.l.b16 %v1084
    %v1356 = vunpack.c.h.b16 %v1084
    %v1357 = vunpack.c.l.b16 %v1085
    %v1358 = vunpack.c.h.b16 %v1085
    %v1359 = vunpack.c.l.b16 %v1086
    %v1360 = vunpack.c.h.b16 %v1086
    %v1361 = vunpack.c.l.b16 %v1087
    %v1362 = vunpack.c.h.b16 %v1087
    %v1363 = vunpack.c.l.b16 %v1088
    %v1364 = vunpack.c.h.b16 %v1088
    %v1365 = vunpack.c.l.b16 %v1089
    %v1366 = vunpack.c.h.b16 %v1089
    %v1367 = vunpack.c.l.b16 %v1090
    %v1368 = vunpack.c.h.b16 %v1090
    %v1369 = vunpack.c.l.b16 %v1091
    %v1370 = vunpack.c.h.b16 %v1091
    %v1371 = vunpack.c.l.b16 %v1092
    %v1372 = vunpack.c.h.b16 %v1092
    %v1373 = vunpack.c.l.b16 %v1093
    %v1374 = vunpack.c.h.b16 %v1093
    %v1375 = vunpack.c.l.b16 %v1094
    %v1376 = vunpack.c.h.b16 %v1094
    %v1377 = vunpack.c.l.b16 %v1095
    %v1378 = vunpack.c.h.b16 %v1095
    %v1379 = vunpack.c.l.b16 %v1096
    %v1380 = vunpack.c.h.b16 %v1096
    %v1381 = vunpack.c.l.b16 %v1097
    %v1382 = vunpack.c.h.b16 %v1097
    %v1383 = vunpack.c.l.b16 %v1098
    %v1384 = vunpack.c.h.b16 %v1098
    %v1385 = vunpack.c.l.b16 %v1099
    %v1386 = vunpack.c.h.b16 %v1099
    %v1387 = vunpack.c.l.b16 %v1100
    %v1388 = vunpack.c.h.b16 %v1100
    %v1389 = vunpack.c.l.b16 %v1101
    %v1390 = vunpack.c.h.b16 %v1101
    %v1391 = vunpack.c.l.b16 %v1102
    %v1392 = vunpack.c.h.b16 %v1102
    %v1393 = vunpack.c.l.b16 %v1103
    %v1394 = vunpack.c.h.b16 %v1103
    %v1395 = vunpack.c.l.b16 %v1104
    %v1396 = vunpack.c.h.b16 %v1104
    %v1397 = vunpack.c.l.b16 %v1105
    %v1398 = vunpack.c.h.b16 %v1105
    %v1399 = vunpack.c.l.b16 %v1106
    %v1400 = vunpack.c.h.b16 %v1106
    %v1401 = vunpack.c.l.b16 %v1107
    %v1402 = vunpack.c.h.b16 %v1107
    %v1403 = vunpack.c.l.b16 %v1108
    %v1404 = vunpack.c.h.b16 %v1108
    %v1405 = vunpack.c.l.b16 %v1109
    %v1406 = vunpack.c.h.b16 %v1109
    %v1407 = vunpack.c.l.b16 %v1110
    %v1408 = vunpack.c.h.b16 %v1110
    %v1409 = vunpack.c.l.b16 %v1111
    %v1410 = vunpack.c.h.b16 %v1111
    %v1411 = vunpack.c.l.b16 %v1112
    %v1412 = vunpack.c.h.b16 %v1112
    %v1413 = vpack.c.b16 %v1299, %v1293
    %v1414 = vpack.c.b16 %v1300, %v1294
    %v1415 = vpack.c.b16 %v1301, %v1295
    %v1416 = vpack.c.b16 %v1302, %v1296
    %v1417 = vpack.c.b16 %v1303, %v1297
    %v1418 = vpack.c.b16 %v1304, %v1298
    %v1419 = vpack.c.b16 %v1311, %v1305
    %v1420 = vpack.c.b16 %v1312, %v1306
    %v1421 = vpack.c.b16 %v1313, %v1307
    %v1422 = vpack.c.b16 %v1314, %v1308
    %v1423 = vpack.c.b16 %v1315, %v1309
    %v1424 = vpack.c.b16 %v1316, %v1310
    %v1425 = vpack.c.b16 %v1323, %v1317
    %v1426 = vpack.c.b16 %v1324, %v1318
    %v1427 = vpack.c.b16 %v1325, %v1319
    %v1428 = vpack.c.b16 %v1326, %v1320
    %v1429 = vpack.c.b16 %v1327, %v1321
    %v1430 = vpack.c.b16 %v1328, %v1322
    %v1431 = vpack.c.b16 %v1335, %v1329
    %v1432 = vpack.c.b16 %v1336, %v1330
    %v1433 = vpack.c.b16 %v1337, %v1331
    %v1434 = vpack.c.b16 %v1338, %v1332
    %v1435 = vpack.c.b16 %v1339, %v1333
    %v1436 = vpack.c.b16 %v1340, %v1334
    %v1437 = vpack.c.b16 %v1347, %v1341
    %v1438 = vpack.c.b16 %v1348, %v1342
    %v1439 = vpack.c.b16 %v1349, %v1343
    %v1440 = vpack.c.b16 %v1350, %v1344
    %v1441 = vpack.c.b16 %v1351, %v1345
    %v1442 = vpack.c.b16 %v1352, %v1346
    %v1443 = vpack.c.b16 %v1359, %v1353
    %v1444 = vpack.c.b16 %v1360, %v1354
    %v1445 = vpack.c.b16 %v1361, %v1355
    %v1446 = vpack.c.b16 %v1362, %v1356
    %v1447 = vpack.c.b16 %v1363, %v1357
    %v1448 = vpack.c.b16 %v1364, %v1358
    %v1449 = vpack.c.b16 %v1371, %v1365
    %v1450 = vpack.c.b16 %v1372, %v1366
    %v1451 = vpack.c.b16 %v1373, %v1367
    %v1452 = vpack.c.b16 %v1374, %v1368
    %v1453 = vpack.c.b16 %v1375, %v1369
    %v1454 = vpack.c.b16 %v1376, %v1370
    %v1455 = vpack.c.b16 %v1383, %v1377
    %v1456 = vpack.c.b16 %v1384, %v1378
    %v1457 = vpack.c.b16 %v1385, %v1379
    %v1458 = vpack.c.b16 %v1386, %v1380
    %v1459 = vpack.c.b16 %v1387, %v1381
    %v1460 = vpack.c.b16 %v1388, %v1382
    %v1461 = vpack.c.b16 %v1395, %v1389
    %v1462 = vpack.c.b16 %v1396, %v1390
    %v1463 = vpack.c.b16 %v1397, %v1391
    %v1464 = vpack.c.b16 %v1398, %v1392
    %v1465 = vpack.c.b16 %v1399, %v1393
    %v1466 = vpack.c.b16 %v1400, %v1394
    %v1467 = vpack.c.b16 %v1407, %v1401
    %v1468 = vpack.c.b16 %v1408, %v1402
    %v1469 = vpack.c.b16 %v1409, %v1403
    %v1470 = vpack.c.b16 %v1410, %v1404
    %v1471 = vpack.c.b16 %v1411, %v1405
    %v1472 = vpack.c.b16 %v1412, %v1406
    %1533 = vmatpush.bf16.msra.mxu0 %v1012
    %1534 = vmatpush.bf16.msra.mxu0 %v1011
    %1535 = vmatpush.bf16.msra.mxu0 %v1010
    %1536 = vmatpush.bf16.msra.mxu0 %v1009
    %1537 = vmatpush.bf16.msra.mxu0 %v1008
    %1538 = vmatpush.bf16.msra.mxu0 %v1007
    %1539 = vmatpush.bf16.msra.mxu0 %v1006
    %1540 = vmatpush.bf16.msra.mxu0 %v1005
    %1541 = vmatmul.bf16.gmra.mxu0 %v1413
    %v1542 = vpop.f32.mrf.mxu0
    %v1543 = vadd.f32 %v1136, %v1542
    %v1544 = vpop.f32.mrf.mxu0
    %v1545 = vadd.f32 %v1141, %v1544
    %1546 = vmatmul.bf16.gmra.mxu0 %v1419
    %v1547 = vpop.f32.mrf.mxu0
    %v1548 = vadd.f32 %v1146, %v1547
    %v1549 = vpop.f32.mrf.mxu0
    %v1550 = vadd.f32 %v1151, %v1549
    %1551 = vmatmul.bf16.gmra.mxu0 %v1425
    %v1552 = vpop.f32.mrf.mxu0
    %v1553 = vadd.f32 %v1156, %v1552
    %v1554 = vpop.f32.mrf.mxu0
    %v1555 = vadd.f32 %v1161, %v1554
    %1556 = vmatmul.bf16.gmra.mxu0 %v1431
    %v1557 = vpop.f32.mrf.mxu0
    %v1558 = vadd.f32 %v1166, %v1557
    %v1559 = vpop.f32.mrf.mxu0
    %v1560 = vadd.f32 %v1171, %v1559
    %1561 = vmatmul.bf16.gmra.mxu0 %v1437
    %v1562 = vpop.f32.mrf.mxu0
    %v1563 = vadd.f32 %v1176, %v1562
    %v1564 = vpop.f32.mrf.mxu0
    %v1565 = vadd.f32 %v1181, %v1564
    %1566 = vmatmul.bf16.gmra.mxu0 %v1443
    %v1567 = vpop.f32.mrf.mxu0
    %v1568 = vadd.f32 %v1186, %v1567
    %v1569 = vpop.f32.mrf.mxu0
    %v1570 = vadd.f32 %v1191, %v1569
    %1571 = vmatmul.bf16.gmra.mxu0 %v1449
    %v1572 = vpop.f32.mrf.mxu0
    %v1573 = vadd.f32 %v1196, %v1572
    %v1574 = vpop.f32.mrf.mxu0
    %v1575 = vadd.f32 %v1201, %v1574
    %1576 = vmatmul.bf16.gmra.mxu0 %v1455
    %v1577 = vpop.f32.mrf.mxu0
    %v1578 = vadd.f32 %v1206, %v1577
    %v1579 = vpop.f32.mrf.mxu0
    %v1580 = vadd.f32 %v1211, %v1579
    %1581 = vmatmul.bf16.gmra.mxu0 %v1461
    %v1582 = vpop.f32.mrf.mxu0
    %v1583 = vadd.f32 %v1216, %v1582
    %v1584 = vpop.f32.mrf.mxu0
    %v1585 = vadd.f32 %v1221, %v1584
    %1586 = vmatmul.bf16.gmra.mxu0 %v1467
    %v1587 = vpop.f32.mrf.mxu0
    %v1588 = vadd.f32 %v1226, %v1587
    %v1589 = vpop.f32.mrf.mxu0
    %v1590 = vadd.f32 %v1231, %v1589
    %1591 = vdwg.mxu0
    %1592 = vmatpush.bf16.msra.mxu0 %v1020
    %1593 = vmatpush.bf16.msra.mxu0 %v1019
    %1594 = vmatpush.bf16.msra.mxu0 %v1018
    %1595 = vmatpush.bf16.msra.mxu0 %v1017
    %1596 = vmatpush.bf16.msra.mxu0 %v1016
    %1597 = vmatpush.bf16.msra.mxu0 %v1015
    %1598 = vmatpush.bf16.msra.mxu0 %v1014
    %1599 = vmatpush.bf16.msra.mxu0 %v1013
    %1600 = vmatmul.bf16.gmra.mxu0 %v1414
    %v1601 = vpop.f32.mrf.mxu0
    %v1602 = vadd.f32 %v1543, %v1601
    %v1603 = vpop.f32.mrf.mxu0
    %v1604 = vadd.f32 %v1545, %v1603
    %1605 = vmatmul.bf16.gmra.mxu0 %v1420
    %v1606 = vpop.f32.mrf.mxu0
    %v1607 = vadd.f32 %v1548, %v1606
    %v1608 = vpop.f32.mrf.mxu0
    %v1609 = vadd.f32 %v1550, %v1608
    %1610 = vmatmul.bf16.gmra.mxu0 %v1426
    %v1611 = vpop.f32.mrf.mxu0
    %v1612 = vadd.f32 %v1553, %v1611
    %v1613 = vpop.f32.mrf.mxu0
    %v1614 = vadd.f32 %v1555, %v1613
    %1615 = vmatmul.bf16.gmra.mxu0 %v1432
    %v1616 = vpop.f32.mrf.mxu0
    %v1617 = vadd.f32 %v1558, %v1616
    %v1618 = vpop.f32.mrf.mxu0
    %v1619 = vadd.f32 %v1560, %v1618
    %1620 = vmatmul.bf16.gmra.mxu0 %v1438
    %v1621 = vpop.f32.mrf.mxu0
    %v1622 = vadd.f32 %v1563, %v1621
    %v1623 = vpop.f32.mrf.mxu0
    %v1624 = vadd.f32 %v1565, %v1623
    %1625 = vmatmul.bf16.gmra.mxu0 %v1444
    %v1626 = vpop.f32.mrf.mxu0
    %v1627 = vadd.f32 %v1568, %v1626
    %v1628 = vpop.f32.mrf.mxu0
    %v1629 = vadd.f32 %v1570, %v1628
    %1630 = vmatmul.bf16.gmra.mxu0 %v1450
    %v1631 = vpop.f32.mrf.mxu0
    %v1632 = vadd.f32 %v1573, %v1631
    %v1633 = vpop.f32.mrf.mxu0
    %v1634 = vadd.f32 %v1575, %v1633
    %1635 = vmatmul.bf16.gmra.mxu0 %v1456
    %v1636 = vpop.f32.mrf.mxu0
    %v1637 = vadd.f32 %v1578, %v1636
    %v1638 = vpop.f32.mrf.mxu0
    %v1639 = vadd.f32 %v1580, %v1638
    %1640 = vmatmul.bf16.gmra.mxu0 %v1462
    %v1641 = vpop.f32.mrf.mxu0
    %v1642 = vadd.f32 %v1583, %v1641
    %v1643 = vpop.f32.mrf.mxu0
    %v1644 = vadd.f32 %v1585, %v1643
    %1645 = vmatmul.bf16.gmra.mxu0 %v1468
    %v1646 = vpop.f32.mrf.mxu0
    %v1647 = vadd.f32 %v1588, %v1646
    %v1648 = vpop.f32.mrf.mxu0
    %v1649 = vadd.f32 %v1590, %v1648
    %1650 = vdwg.mxu0
    %1651 = vmatpush.bf16.msra.mxu0 %v1028
    %1652 = vmatpush.bf16.msra.mxu0 %v1027
    %1653 = vmatpush.bf16.msra.mxu0 %v1026
    %1654 = vmatpush.bf16.msra.mxu0 %v1025
    %1655 = vmatpush.bf16.msra.mxu0 %v1024
    %1656 = vmatpush.bf16.msra.mxu0 %v1023
    %1657 = vmatpush.bf16.msra.mxu0 %v1022
    %1658 = vmatpush.bf16.msra.mxu0 %v1021
    %1659 = vmatmul.bf16.gmra.mxu0 %v1415
    %v1660 = vpop.f32.mrf.mxu0
    %v1661 = vadd.f32 %v1602, %v1660
    %v1662 = vpop.f32.mrf.mxu0
    %v1663 = vadd.f32 %v1604, %v1662
    %1664 = vmatmul.bf16.gmra.mxu0 %v1421
    %v1665 = vpop.f32.mrf.mxu0
    %v1666 = vadd.f32 %v1607, %v1665
    %v1667 = vpop.f32.mrf.mxu0
    %v1668 = vadd.f32 %v1609, %v1667
    %1669 = vmatmul.bf16.gmra.mxu0 %v1427
    %v1670 = vpop.f32.mrf.mxu0
    %v1671 = vadd.f32 %v1612, %v1670
    %v1672 = vpop.f32.mrf.mxu0
    %v1673 = vadd.f32 %v1614, %v1672
    %1674 = vmatmul.bf16.gmra.mxu0 %v1433
    %v1675 = vpop.f32.mrf.mxu0
    %v1676 = vadd.f32 %v1617, %v1675
    %v1677 = vpop.f32.mrf.mxu0
    %v1678 = vadd.f32 %v1619, %v1677
    %1679 = vmatmul.bf16.gmra.mxu0 %v1439
    %v1680 = vpop.f32.mrf.mxu0
    %v1681 = vadd.f32 %v1622, %v1680
    %v1682 = vpop.f32.mrf.mxu0
    %v1683 = vadd.f32 %v1624, %v1682
    %1684 = vmatmul.bf16.gmra.mxu0 %v1445
    %v1685 = vpop.f32.mrf.mxu0
    %v1686 = vadd.f32 %v1627, %v1685
    %v1687 = vpop.f32.mrf.mxu0
    %v1688 = vadd.f32 %v1629, %v1687
    %1689 = vmatmul.bf16.gmra.mxu0 %v1451
    %v1690 = vpop.f32.mrf.mxu0
    %v1691 = vadd.f32 %v1632, %v1690
    %v1692 = vpop.f32.mrf.mxu0
    %v1693 = vadd.f32 %v1634, %v1692
    %1694 = vmatmul.bf16.gmra.mxu0 %v1457
    %v1695 = vpop.f32.mrf.mxu0
    %v1696 = vadd.f32 %v1637, %v1695
    %v1697 = vpop.f32.mrf.mxu0
    %v1698 = vadd.f32 %v1639, %v1697
    %1699 = vmatmul.bf16.gmra.mxu0 %v1463
    %v1700 = vpop.f32.mrf.mxu0
    %v1701 = vadd.f32 %v1642, %v1700
    %v1702 = vpop.f32.mrf.mxu0
    %v1703 = vadd.f32 %v1644, %v1702
    %1704 = vmatmul.bf16.gmra.mxu0 %v1469
    %v1705 = vpop.f32.mrf.mxu0
    %v1706 = vadd.f32 %v1647, %v1705
    %v1707 = vpop.f32.mrf.mxu0
    %v1708 = vadd.f32 %v1649, %v1707
    %1709 = vdwg.mxu0
    %1710 = vmatpush.bf16.msra.mxu0 %v1036
    %1711 = vmatpush.bf16.msra.mxu0 %v1035
    %1712 = vmatpush.bf16.msra.mxu0 %v1034
    %1713 = vmatpush.bf16.msra.mxu0 %v1033
    %1714 = vmatpush.bf16.msra.mxu0 %v1032
    %1715 = vmatpush.bf16.msra.mxu0 %v1031
    %1716 = vmatpush.bf16.msra.mxu0 %v1030
    %1717 = vmatpush.bf16.msra.mxu0 %v1029
    %1718 = vmatmul.bf16.gmra.mxu0 %v1416
    %v1719 = vpop.f32.mrf.mxu0
    %v1720 = vadd.f32 %v1661, %v1719
    %v1721 = vpop.f32.mrf.mxu0
    %v1722 = vadd.f32 %v1663, %v1721
    %1723 = vmatmul.bf16.gmra.mxu0 %v1422
    %v1724 = vpop.f32.mrf.mxu0
    %v1725 = vadd.f32 %v1666, %v1724
    %v1726 = vpop.f32.mrf.mxu0
    %v1727 = vadd.f32 %v1668, %v1726
    %1728 = vmatmul.bf16.gmra.mxu0 %v1428
    %v1729 = vpop.f32.mrf.mxu0
    %v1730 = vadd.f32 %v1671, %v1729
    %v1731 = vpop.f32.mrf.mxu0
    %v1732 = vadd.f32 %v1673, %v1731
    %1733 = vmatmul.bf16.gmra.mxu0 %v1434
    %v1734 = vpop.f32.mrf.mxu0
    %v1735 = vadd.f32 %v1676, %v1734
    %v1736 = vpop.f32.mrf.mxu0
    %v1737 = vadd.f32 %v1678, %v1736
    %1738 = vmatmul.bf16.gmra.mxu0 %v1440
    %v1739 = vpop.f32.mrf.mxu0
    %v1740 = vadd.f32 %v1681, %v1739
    %v1741 = vpop.f32.mrf.mxu0
    %v1742 = vadd.f32 %v1683, %v1741
    %1743 = vmatmul.bf16.gmra.mxu0 %v1446
    %v1744 = vpop.f32.mrf.mxu0
    %v1745 = vadd.f32 %v1686, %v1744
    %v1746 = vpop.f32.mrf.mxu0
    %v1747 = vadd.f32 %v1688, %v1746
    %1748 = vmatmul.bf16.gmra.mxu0 %v1452
    %v1749 = vpop.f32.mrf.mxu0
    %v1750 = vadd.f32 %v1691, %v1749
    %v1751 = vpop.f32.mrf.mxu0
    %v1752 = vadd.f32 %v1693, %v1751
    %1753 = vmatmul.bf16.gmra.mxu0 %v1458
    %v1754 = vpop.f32.mrf.mxu0
    %v1755 = vadd.f32 %v1696, %v1754
    %v1756 = vpop.f32.mrf.mxu0
    %v1757 = vadd.f32 %v1698, %v1756
    %1758 = vmatmul.bf16.gmra.mxu0 %v1464
    %v1759 = vpop.f32.mrf.mxu0
    %v1760 = vadd.f32 %v1701, %v1759
    %v1761 = vpop.f32.mrf.mxu0
    %v1762 = vadd.f32 %v1703, %v1761
    %1763 = vmatmul.bf16.gmra.mxu0 %v1470
    %v1764 = vpop.f32.mrf.mxu0
    %v1765 = vadd.f32 %v1706, %v1764
    %v1766 = vpop.f32.mrf.mxu0
    %v1767 = vadd.f32 %v1708, %v1766
    %1768 = vdwg.mxu0
    %1769 = vmatpush.bf16.msra.mxu0 %v1044
    %1770 = vmatpush.bf16.msra.mxu0 %v1043
    %1771 = vmatpush.bf16.msra.mxu0 %v1042
    %1772 = vmatpush.bf16.msra.mxu0 %v1041
    %1773 = vmatpush.bf16.msra.mxu0 %v1040
    %1774 = vmatpush.bf16.msra.mxu0 %v1039
    %1775 = vmatpush.bf16.msra.mxu0 %v1038
    %1776 = vmatpush.bf16.msra.mxu0 %v1037
    %1777 = vmatmul.bf16.gmra.mxu0 %v1417
    %v1778 = vpop.f32.mrf.mxu0
    %v1779 = vadd.f32 %v1720, %v1778
    %v1780 = vpop.f32.mrf.mxu0
    %v1781 = vadd.f32 %v1722, %v1780
    %1782 = vmatmul.bf16.gmra.mxu0 %v1423
    %v1783 = vpop.f32.mrf.mxu0
    %v1784 = vadd.f32 %v1725, %v1783
    %v1785 = vpop.f32.mrf.mxu0
    %v1786 = vadd.f32 %v1727, %v1785
    %1787 = vmatmul.bf16.gmra.mxu0 %v1429
    %v1788 = vpop.f32.mrf.mxu0
    %v1789 = vadd.f32 %v1730, %v1788
    %v1790 = vpop.f32.mrf.mxu0
    %v1791 = vadd.f32 %v1732, %v1790
    %1792 = vmatmul.bf16.gmra.mxu0 %v1435
    %v1793 = vpop.f32.mrf.mxu0
    %v1794 = vadd.f32 %v1735, %v1793
    %v1795 = vpop.f32.mrf.mxu0
    %v1796 = vadd.f32 %v1737, %v1795
    %1797 = vmatmul.bf16.gmra.mxu0 %v1441
    %v1798 = vpop.f32.mrf.mxu0
    %v1799 = vadd.f32 %v1740, %v1798
    %v1800 = vpop.f32.mrf.mxu0
    %v1801 = vadd.f32 %v1742, %v1800
    %1802 = vmatmul.bf16.gmra.mxu0 %v1447
    %v1803 = vpop.f32.mrf.mxu0
    %v1804 = vadd.f32 %v1745, %v1803
    %v1805 = vpop.f32.mrf.mxu0
    %v1806 = vadd.f32 %v1747, %v1805
    %1807 = vmatmul.bf16.gmra.mxu0 %v1453
    %v1808 = vpop.f32.mrf.mxu0
    %v1809 = vadd.f32 %v1750, %v1808
    %v1810 = vpop.f32.mrf.mxu0
    %v1811 = vadd.f32 %v1752, %v1810
    %1812 = vmatmul.bf16.gmra.mxu0 %v1459
    %v1813 = vpop.f32.mrf.mxu0
    %v1814 = vadd.f32 %v1755, %v1813
    %v1815 = vpop.f32.mrf.mxu0
    %v1816 = vadd.f32 %v1757, %v1815
    %1817 = vmatmul.bf16.gmra.mxu0 %v1465
    %v1818 = vpop.f32.mrf.mxu0
    %v1819 = vadd.f32 %v1760, %v1818
    %v1820 = vpop.f32.mrf.mxu0
    %v1821 = vadd.f32 %v1762, %v1820
    %1822 = vmatmul.bf16.gmra.mxu0 %v1471
    %v1823 = vpop.f32.mrf.mxu0
    %v1824 = vadd.f32 %v1765, %v1823
    %v1825 = vpop.f32.mrf.mxu0
    %v1826 = vadd.f32 %v1767, %v1825
    %1827 = vdwg.mxu0
    %1828 = vmatpush.bf16.msra.mxu0 %v1052
    %1829 = vmatpush.bf16.msra.mxu0 %v1051
    %1830 = vmatpush.bf16.msra.mxu0 %v1050
    %1831 = vmatpush.bf16.msra.mxu0 %v1049
    %1832 = vmatpush.bf16.msra.mxu0 %v1048
    %1833 = vmatpush.bf16.msra.mxu0 %v1047
    %1834 = vmatpush.bf16.msra.mxu0 %v1046
    %1835 = vmatpush.bf16.msra.mxu0 %v1045
    %1836 = vmatmul.bf16.gmra.mxu0 %v1418
    %v1837 = vpop.f32.mrf.mxu0
    %v1838 = vadd.f32 %v1779, %v1837
    %v1839 = vpop.f32.mrf.mxu0
    %v1840 = vadd.f32 %v1781, %v1839
    %1841 = vmatmul.bf16.gmra.mxu0 %v1424
    %v1842 = vpop.f32.mrf.mxu0
    %v1843 = vadd.f32 %v1784, %v1842
    %v1844 = vpop.f32.mrf.mxu0
    %v1845 = vadd.f32 %v1786, %v1844
    %1846 = vmatmul.bf16.gmra.mxu0 %v1430
    %v1847 = vpop.f32.mrf.mxu0
    %v1848 = vadd.f32 %v1789, %v1847
    %v1849 = vpop.f32.mrf.mxu0
    %v1850 = vadd.f32 %v1791, %v1849
    %1851 = vmatmul.bf16.gmra.mxu0 %v1436
    %v1852 = vpop.f32.mrf.mxu0
    %v1853 = vadd.f32 %v1794, %v1852
    %v1854 = vpop.f32.mrf.mxu0
    %v1855 = vadd.f32 %v1796, %v1854
    %1856 = vmatmul.bf16.gmra.mxu0 %v1442
    %v1857 = vpop.f32.mrf.mxu0
    %v1858 = vadd.f32 %v1799, %v1857
    %v1859 = vpop.f32.mrf.mxu0
    %v1860 = vadd.f32 %v1801, %v1859
    %1861 = vmatmul.bf16.gmra.mxu0 %v1448
    %v1862 = vpop.f32.mrf.mxu0
    %v1863 = vadd.f32 %v1804, %v1862
    %v1864 = vpop.f32.mrf.mxu0
    %v1865 = vadd.f32 %v1806, %v1864
    %1866 = vmatmul.bf16.gmra.mxu0 %v1454
    %v1867 = vpop.f32.mrf.mxu0
    %v1868 = vadd.f32 %v1809, %v1867
    %v1869 = vpop.f32.mrf.mxu0
    %v1870 = vadd.f32 %v1811, %v1869
    %1871 = vmatmul.bf16.gmra.mxu0 %v1460
    %v1872 = vpop.f32.mrf.mxu0
    %v1873 = vadd.f32 %v1814, %v1872
    %v1874 = vpop.f32.mrf.mxu0
    %v1875 = vadd.f32 %v1816, %v1874
    %1876 = vmatmul.bf16.gmra.mxu0 %v1466
    %v1877 = vpop.f32.mrf.mxu0
    %v1878 = vadd.f32 %v1819, %v1877
    %v1879 = vpop.f32.mrf.mxu0
    %v1880 = vadd.f32 %v1821, %v1879
    %1881 = vmatmul.bf16.gmra.mxu0 %v1472
    %v1882 = vpop.f32.mrf.mxu0
    %v1883 = vadd.f32 %v1824, %v1882
    %v1884 = vpop.f32.mrf.mxu0
    %v1885 = vadd.f32 %v1826, %v1884
    %1886 = vdwg.mxu0
    %v1887 = vpack.c.bf16 %v1840, %v1838
    %v1888 = vpack.c.bf16 %v1845, %v1843
    %v1889 = vpack.c.bf16 %v1850, %v1848
    %v1890 = vpack.c.bf16 %v1855, %v1853
    %v1891 = vpack.c.bf16 %v1860, %v1858
    %v1892 = vpack.c.bf16 %v1865, %v1863
    %v1893 = vpack.c.bf16 %v1870, %v1868
    %v1894 = vpack.c.bf16 %v1875, %v1873
    %v1895 = vpack.c.bf16 %v1880, %v1878
    %v1896 = vpack.c.bf16 %v1885, %v1883
    %v1897 = vunpack.c.l.bf16 %v1887
    %v1898 = vunpack.c.h.bf16 %v1887
    %v1899 = vunpack.c.l.bf16 %v1888
    %v1900 = vunpack.c.h.bf16 %v1888
    %v1901 = vunpack.c.l.bf16 %v1889
    %v1902 = vunpack.c.h.bf16 %v1889
    %v1903 = vunpack.c.l.bf16 %v1890
    %v1904 = vunpack.c.h.bf16 %v1890
    %v1905 = vunpack.c.l.bf16 %v1891
    %v1906 = vunpack.c.h.bf16 %v1891
    %v1907 = vunpack.c.l.bf16 %v1892
    %v1908 = vunpack.c.h.bf16 %v1892
    %v1909 = vunpack.c.l.bf16 %v1893
    %v1910 = vunpack.c.h.bf16 %v1893
    %v1911 = vunpack.c.l.bf16 %v1894
    %v1912 = vunpack.c.h.bf16 %v1894
    %v1913 = vunpack.c.l.bf16 %v1895
    %v1914 = vunpack.c.h.bf16 %v1895
    %v1915 = vunpack.c.l.bf16 %v1896
    %v1916 = vunpack.c.h.bf16 %v1896
    %v1917 = vtanh.pop %v1897
    %v1918 = vtanh.pop %v1898
    %v1919 = vtanh.pop %v1899
    %v1920 = vtanh.pop %v1900
    %v1921 = vtanh.pop %v1901
    %v1922 = vtanh.pop %v1902
    %v1923 = vtanh.pop %v1903
    %v1924 = vtanh.pop %v1904
    %v1925 = vtanh.pop %v1905
    %v1926 = vtanh.pop %v1906
    %v1927 = vtanh.pop %v1907
    %v1928 = vtanh.pop %v1908
    %v1929 = vtanh.pop %v1909
    %v1930 = vtanh.pop %v1910
    %v1931 = vtanh.pop %v1911
    %v1932 = vtanh.pop %v1912
    %v1933 = vtanh.pop %v1913
    %v1934 = vtanh.pop %v1914
    %v1935 = vtanh.pop %v1915
    %v1936 = vtanh.pop %v1916
    %v1937 = vpack.c.bf16 %v1918, %v1917
    %v1938 = vpack.c.bf16 %v1920, %v1919
    %v1939 = vpack.c.bf16 %v1922, %v1921
    %v1940 = vpack.c.bf16 %v1924, %v1923
    %v1941 = vpack.c.bf16 %v1926, %v1925
    %v1942 = vpack.c.bf16 %v1928, %v1927
    %v1943 = vpack.c.bf16 %v1930, %v1929
    %v1944 = vpack.c.bf16 %v1932, %v1931
    %v1945 = vpack.c.bf16 %v1934, %v1933
    %v1946 = vpack.c.bf16 %v1936, %v1935
    %v1947 = vld [vmem:[%s5] sm:$0xff]
    %v1948 = vld [vmem:[%s5 + $0x8] sm:$0xff]
    %v1949 = vld [vmem:[%s5 + $0x10] sm:$0xff]
    %v1950 = vld [vmem:[%s6] sm:$0xff]
    %v1951 = vld [vmem:[%s6 + $0x8] sm:$0xff]
    %v1952 = vld [vmem:[%s6 + $0x10] sm:$0xff]
    %1954 = vset.pattern.permute.xlu0 0
    %1955 = vperm.xlu0 %1954, %v1950
    %v1956 = vpop.permute.xlu0 %1955
    %1959 = vset.pattern.permute.xlu0 0
    %1960 = vperm.xlu0 %1959, %v1951
    %v1961 = vpop.permute.xlu0 %1960
    %1964 = vset.pattern.permute.xlu0 0
    %1965 = vperm.xlu0 %1964, %v1952
    %v1966 = vpop.permute.xlu0 %1965
    %v1971 = vunpack.c.l.b16 %v1947
    %v1972 = vunpack.c.h.b16 %v1947
    %v1973 = vunpack.c.l.b16 %v1948
    %v1974 = vunpack.c.h.b16 %v1948
    %v1975 = vunpack.c.l.b16 %v1949
    %v1976 = vunpack.c.h.b16 %v1949
    %v1977 = vpack.c.b16 %v1973, %v1971
    %v1978 = vpack.c.b16 %v1974, %v1972
    %v1979 = vpack.c.b16 %v1975, %v1975
    %v1980 = vpack.c.b16 %v1976, %v1976
    %vm1983 = vcmask 261120
    %v1985 = vsel %vm1983, %v1978, 0
    %v1988 = vsel %vm1983, %v1980, 0
    %1990 = vmatpush.bf16.msra.mxu0 %v1944
    %1991 = vmatpush.bf16.msra.mxu0 %v1943
    %1992 = vmatpush.bf16.msra.mxu0 %v1942
    %1993 = vmatpush.bf16.msra.mxu0 %v1941
    %1994 = vmatpush.bf16.msra.mxu0 %v1940
    %1995 = vmatpush.bf16.msra.mxu0 %v1939
    %1996 = vmatpush.bf16.msra.mxu0 %v1938
    %1997 = vmatpush.bf16.msra.mxu0 %v1937
    %1998 = vmatmul.bf16.gmra.mxu0 %v1977
    %v1999 = vpop.f32.mrf.mxu0
    %v2000 = vadd.f32 %v1956, %v1999
    %v2001 = vpop.f32.mrf.mxu0
    %v2002 = vadd.f32 %v1961, %v2001
    %2003 = vmatmul.bf16.gmra.mxu0 %v1979
    %v2004 = vpop.f32.mrf.mxu0
    %v2005 = vadd.f32 %v1966, %v2004
    %v2006 = vpop.f32.mrf.mxu0
    %2007 = vdwg.mxu0
    %2008 = vmatpush.bf16.msra.mxu0 0
    %2009 = vmatpush.bf16.msra.mxu0 0
    %2010 = vmatpush.bf16.msra.mxu0 0
    %2011 = vmatpush.bf16.msra.mxu0 0
    %2012 = vmatpush.bf16.msra.mxu0 0
    %2013 = vmatpush.bf16.msra.mxu0 0
    %2014 = vmatpush.bf16.msra.mxu0 %v1946
    %2015 = vmatpush.bf16.msra.mxu0 %v1945
    %2016 = vmatmul.bf16.gmra.mxu0 %v1985
    %v2017 = vpop.f32.mrf.mxu0
    %v2018 = vadd.f32 %v2000, %v2017
    %v2019 = vpop.f32.mrf.mxu0
    %v2020 = vadd.f32 %v2002, %v2019
    %2021 = vmatmul.bf16.gmra.mxu0 %v1988
    %v2022 = vpop.f32.mrf.mxu0
    %v2023 = vadd.f32 %v2005, %v2022
    %v2024 = vpop.f32.mrf.mxu0
    %2025 = vdwg.mxu0
    %vm2026 = vcmp.gt.f32.partialorder %v2020, 20.0
    %v2027 = vmin.f32 %v2020, 20.0
    %v2028 = vmul.f32 %v2027, 1.442695
    %v2029 = vpow.pop %v2028
    %v2030 = vadd.f32 %v2029, 1.0
    %v2031 = vlog2.pop %v2030
    %v2032 = vmul.f32 %v2031, 0.6931472
    %v2033 = vsel %vm2026, %v2020, %v2032
    %v2034 = vmul.f32 %v2033, 10.0
    %v2035 = vld [vmem:[%s1] sm:$0xf]
    %v2036 = vsub.f32 %v2035, %v2018
    %v2037 = vrcp.pop %v2034
    %v2038 = vmul.f32 %v2023, %v2036
    %v2039 = vmul.f32 %v2038, %v2037
    %v2040 = vsub.f32 %v2039, 13.0
    %v2041 = vmul.f32 %v2040, 2509.0
    %v2042 = vsub.f32 %v2039, 40.0
    %v2043 = vmul.f32 %v2042, %v2042
    %v2044 = vsub.f32 %v2039, 5.0
    %v2045 = vmul.f32 %v2043, %v2044
    %v2046 = vrcp.pop %v2045
    %v2047 = vmul.f32 %v2041, %v2046
    %vm2048 = vcmp.lt.f32.partialorder %v2039, -0.1
    %v2049 = vmul.f32 %v2039, -0.5
    %v2050 = vmul.f32 %v2049, %v2039
    %v2051 = vsub.f32 %v2050, 4.8
    %v2052 = vadd.f32 %v2051, %v2047
    %v2053 = vsub.f32 0.0, %v2039
    %v2054 = vmul.f32 %v2053, 2.0
    %v2055 = vmul.f32 %v2054, 1.442695
    %v2056 = vpow.pop %v2055
    %v2057 = vsub.f32 0.0, %v2056
    %v2058 = vmul.f32 %v2057, 0.5
    %v2059 = vsub.f32 %v2039, 0.2
    %v2060 = vmul.f32 %v2059, %v2059
    %v2061 = vsub.f32 0.0, %v2060
    %v2062 = vmul.f32 %v2061, 1.442695
    %v2063 = vpow.pop %v2062
    %v2064 = vmul.f32 %v2063, 0.2
    %v2065 = vsub.f32 %v2058, %v2064
    %v2066 = vsel %vm2048, %v2052, %v2065
    %v2067 = vmul.f32 %v2053, 0.70710677
    %v2068 = vand.u32 2147483647, %v2067
    %v2069 = vmul.f32 %v2068, 0.5
    %v2070 = vadd.f32 %v2069, 1.0
    %v2071 = vrcp.pop %v2070
    %v2072 = vmul.f32 %v2071, 0.17087276
    %v2073 = vadd.f32 %v2072, -0.82215226
    %v2074 = vmul.f32 %v2071, %v2073
    %v2075 = vadd.f32 %v2074, 1.4885159
    %v2076 = vmul.f32 %v2071, %v2075
    %v2077 = vadd.f32 %v2076, -1.135204
    %v2078 = vmul.f32 %v2071, %v2077
    %v2079 = vadd.f32 %v2078, 0.27886808
    %v2080 = vmul.f32 %v2071, %v2079
    %v2081 = vadd.f32 %v2080, -0.18628806
    %v2082 = vmul.f32 %v2071, %v2081
    %v2083 = vadd.f32 %v2082, 0.09678418
    %v2084 = vmul.f32 %v2071, %v2083
    %v2085 = vadd.f32 %v2084, 0.37409195
    %v2086 = vmul.f32 %v2071, %v2085
    %v2087 = vadd.f32 %v2086, 1.0000237
    %v2088 = vmul.f32 %v2071, %v2087
    %v2089 = vadd.f32 %v2088, -1.2655122
    %v2090 = vsub.f32 0.0, %v2068
    %v2091 = vmul.f32 %v2090, %v2068
    %v2092 = vadd.f32 %v2091, %v2089
    %v2093 = vmul.f32 %v2092, 1.442695
    %v2094 = vpow.pop %v2093
    %v2095 = vmul.f32 %v2071, %v2094
    %vm2096 = vcmp.ge.f32.partialorder %v2067, 0.0
    %v2097 = vsub.f32 2.0, %v2095
    %v2098 = vsel %vm2096, %v2095, %v2097
    %v2099 = vmul.f32 %v2098, 0.5
    %v2100 = vlog2.pop %v2099
    %v2101 = vmul.f32 %v2100, 0.6931472
    %s2102 = smul.u32 0, 128
    %s2103 = ssub.s32 8, %s2102
    %v2104 = vlaneseq
    %v2105 = vand.u32 %v2104, 127
    %v2106 = vstv %s2103
    %vm2107 = vcmp.lt.s32.totalorder %v2105, %v2106
    %v2108 = vsel %vm2107, %v2039, 0.0
    %vm2109 = vcmask 1043456
    %v2110 = vsel %vm2109, %v2108, inf
    %2111 = vmin.xlane.f32.xlu0 %v2110
    %v2112 = vpop.xlane.xlu0 %2111
    %v2113 = vrot.slane %v2112, 4
    %v2114 = vmin.f32 %v2112, %v2113
    %v2115 = vrot.slane %v2114, 2
    %v2116 = vmin.f32 %v2114, %v2115
    %v2117 = vrot.slane %v2116, 1
    %v2118 = vmin.f32 %v2116, %v2117
    %s2119 = vtos %v2118
    %p2120 = scmp.lt.f32.partialorder %s2119, -7.0
    %s2121 = scalar_select %p2120, 1, 0
    %v2122 = vstv %s2121
    %vm2123 = vcmp.eq.s32.totalorder %v2122, 1
    %v2124 = vsel %vm2123, %v2066, %v2101
    %v2125 = vmul.f32 %v2036, %v2037
    %v2126 = vmul.f32 %v2125, 0.5
    %v2127 = vmul.f32 %v2126, %v2125
    %v2128 = vlog2.pop %v2034
    %v2129 = vmul.f32 %v2128, 0.6931472
    %v2130 = vadd.f32 %v2127, %v2129
    %v2131 = vsub.f32 %v2130, %v2124
    %v2132 = vsel %vm2109, %v2131, 0.0
    %v2133 = vrot.slane %v2132, 4
    %v2134 = vadd.f32 %v2132, %v2133
    %v2135 = vrot.slane %v2134, 2
    %v2136 = vadd.f32 %v2134, %v2135
    %v2137 = vrot.slane %v2136, 1
    %v2138 = vadd.f32 %v2136, %v2137
    %v2139 = vrcp.pop 4.0
    %v2140 = vmul.f32 4.0, %v2139
    %v2141 = vsub.f32 1.0, %v2140
    %v2142 = vmul.f32 %v2139, %v2141
    %v2143 = vadd.f32 %v2139, %v2142
    %vm2144 = vweird.f32 %v2139
    %v2145 = vsel %vm2144, %v2139, %v2143
    %v2146 = vmul.f32 %v2138, %v2145
    %2147 = vst [vmem:[#allocation2] sm:$0x1] %v2146
    // Predicated region
    $region30: #{_forward_impl.1} parent=1 // pred_check
      _
    $region31: #{_forward_impl.1} parent=1 // pred_check_branch
      %2149 = sbr.rel (0) target = $region33
    $region32: #{_forward_impl.1} parent=1 // pred_region
      %2151 = vsyncadd [#allocation3], 0
      %s2153 = sshll.u32 [#allocation2], 4
      %s2154 = int_to_ptr.vmem [resolvable:$true] %s2153
      %s2155 = sshll.u32 %s7, 4
      %s2156 = int_to_ptr.hbm [resolvable:$true] %s2155
      %2158 = dma.vmem_to_hbm [thread:$0]  %s2154, 16, %s2156, [#allocation3]
    $region33: #{_forward_impl.1} parent=1 // pred_fallthru
      _
    // Predicated region
    $region34: #{_forward_impl.1} parent=1 // pred_check
      _
    $region35: #{_forward_impl.1} parent=1 // pred_check_branch
      %2160 = sbr.rel (0) target = $region37
    $region36: #{_forward_impl.1} parent=1 // pred_region
      %2162 = dma.done [#allocation3], 16
    $region37: #{_forward_impl.1} parent=1 // pred_fallthru
      _
    %2163 = vsyncpa [#allocation3], 1

</llo_original>
